<compile_context>
chip_gen: v5e
topology: v5e:2x2
jax: 0.10.0
libtpu: 0.0.40
codegen_flags: <defaults>
</compile_context>

<pallas_src>
import functools

import jax
import jax.numpy as jnp
from jax.experimental import pallas as pl
from jax.experimental.pallas import tpu as pltpu


# ----------------------------------------------------------------------------
# Fused Pallas kernel (one grid step = one graph of n nodes):
# GATConv(heads=8, concat) + ReLU -> GATConv(heads=1) -> stacked class heads.
# ----------------------------------------------------------------------------
def _gat_fused_kernel(h1p_ref, adj_ref, a1_ref, b1_ref, w2_ref, a2_ref, b2_ref,
                      wh_ref, bh_ref, out_ref, h1_scr, *, heads, out_ch):
    """
    h1p_ref : [1, n, H*C] bf16  node features already projected by layer-0 lin
    adj_ref : [1, n, n]   bf16  adjacency, adj[i, j] = 1 iff edge j -> i (+ self loops)
    a1_ref  : [H*C, 2H]   bf16  block-diagonal att matrices (cols 0:H src, H:2H dst)
    b1_ref  : [1, H*C]    f32   layer-0 bias
    w2_ref  : [H*C, C]    bf16  layer-1 lin weight
    a2_ref  : [C, 2]      bf16  layer-1 att vectors (col 0 = src, col 1 = dst)
    b2_ref  : [1, C]      f32   layer-1 bias
    wh_ref  : [C, TCp]    bf16  stacked per-node class-head weights (lane padded)
    bh_ref  : [1, TCp]    f32   stacked head biases (lane padded)
    out_ref : [1, n, TCp] f32   stacked logits for every node's head
    h1_scr  : [n, H*C]    f32   VMEM scratch holding layer-0 output
    """
    n = h1p_ref.shape[1]
    neg = jnp.float32(-1e30)

    # boolean edge mask computed ONCE from the resident bf16 adjacency; shared
    # by all 8 heads of layer 0 and by layer 1 (no persistent f32 [n,n] buffer).
    edge = adj_ref[0] > 0                                               # [n, n] bool
    ones_col = jnp.ones((n, 1), jnp.bfloat16)                           # row-sum fuser

    # ---------------- layer 0: GATConv(emb->hidden, heads=H, concat) --------
    h1p = h1p_ref[0]                                                    # [n, H*C] bf16
    # all heads' attention coefficients from ONE bf16 MXU matmul (block-diag a1)
    e_all = jnp.dot(h1p, a1_ref[...], preferred_element_type=jnp.float32)  # [n, 2H] f32
    e_src = e_all[:, :heads]                                            # [n, H]
    e_dst = e_all[:, heads:]                                            # [n, H]
    e_src_t = jnp.transpose(e_src)                                      # [H, n] (1 transpose)

    # NOTE: per-graph n (= len(node_classes)) is small, so a static unrolled
    # head loop is fine; each head's live [n, n] tensors are tiny after the
    # batch-grid change.
    for hd in range(heads):
        hh = h1p[:, hd * out_ch:(hd + 1) * out_ch]                      # [n, C] bf16
        # ones column fused into the aggregation matmul -> row-sum comes out of
        # the MXU instead of an XLU cross-lane reduction.
        hh_aug = jnp.concatenate([hh, ones_col], axis=1)                # [n, C+1] bf16
        # scores[i, j] = att_dst . h_i + att_src . h_j
        scores = e_dst[:, hd:hd + 1] + e_src_t[hd:hd + 1, :]            # [n, n] f32
        scores = jnp.where(scores > 0, scores, 0.2 * scores)            # LeakyReLU(0.2)
        scores = jnp.where(edge, scores, neg)                           # mask non-edges
        m = jnp.max(scores, axis=1, keepdims=True)                      # per-row masked max
        p = jnp.exp(scores - m).astype(jnp.bfloat16)                    # 0 on non-edges
        agg = jnp.dot(p, hh_aug, preferred_element_type=jnp.float32)    # [n, C+1] f32
        # normalize AFTER aggregation with an EUP reciprocal; rs is the fused
        # last column.  Each head writes its slot of the VMEM scratch directly.
        h1_scr[:, hd * out_ch:(hd + 1) * out_ch] = (
            agg[:, :out_ch] * pl.reciprocal(agg[:, out_ch:out_ch + 1], approx=True))

    h1 = jnp.maximum(h1_scr[...] + b1_ref[...], 0.0).astype(jnp.bfloat16)  # bias+ReLU

    # ------------- layer 1: GATConv(H*C -> C, heads=1, concat=False) --------
    f2 = jnp.dot(h1, w2_ref[...], preferred_element_type=jnp.float32)   # [n, C] f32
    f2b = f2.astype(jnp.bfloat16)
    e2 = jnp.dot(f2b, a2_ref[...], preferred_element_type=jnp.float32)  # [n, 2] f32
    scores2 = e2[:, 1:2] + jnp.transpose(e2[:, 0:1])                    # [n, n]
    scores2 = jnp.where(scores2 > 0, scores2, 0.2 * scores2)
    scores2 = jnp.where(edge, scores2, neg)
    m2 = jnp.max(scores2, axis=1, keepdims=True)
    p2 = jnp.exp(scores2 - m2).astype(jnp.bfloat16)
    f2_aug = jnp.concatenate([f2b, ones_col], axis=1)                   # [n, C+1] bf16
    agg2 = jnp.dot(p2, f2_aug, preferred_element_type=jnp.float32)      # [n, C+1] f32
    h2 = (agg2[:, :out_ch] * pl.reciprocal(agg2[:, out_ch:out_ch + 1], approx=True)
          + b2_ref[...])                                                # [n, C] f32

    # ------------- all per-node classification heads: one matmul ------------
    out_ref[0] = (jnp.dot(h2.astype(jnp.bfloat16), wh_ref[...],
                          preferred_element_type=jnp.float32) + bh_ref[...])


def gat_forward(h1p, adj, a1, b1, w2, a2, b2, wh, bh, *, heads, out_ch):
    batch, n, hc = h1p.shape
    tc = wh.shape[1]
    kernel = functools.partial(_gat_fused_kernel, heads=heads, out_ch=out_ch)
    bmap = lambda b: (b, 0, 0)     # per-graph blocks
    wmap = lambda b: (0, 0)        # weights: same block every step -> no re-DMA
    # TODO(synk): if per-graph node counts ever get large, additionally tile the
    # destination-row axis (grid over rows, online softmax) so the [n, n] score
    # matrix is never fully materialized in VMEM.
    return pl.pallas_call(
        kernel,
        out_shape=jax.ShapeDtypeStruct((batch, n, tc), jnp.float32),
        grid_spec=pltpu.PrefetchScalarGridSpec(
            num_scalar_prefetch=0,
            grid=(batch,),
            in_specs=[
                pl.BlockSpec((1, n, hc), bmap),        # h1p (per graph)
                pl.BlockSpec((1, n, n), bmap),         # adj (per graph)
                pl.BlockSpec((hc, 2 * heads), wmap),   # a1
                pl.BlockSpec((1, hc), wmap),           # b1
                pl.BlockSpec((hc, out_ch), wmap),      # w2
                pl.BlockSpec((out_ch, 2), wmap),       # a2
                pl.BlockSpec((1, out_ch), wmap),       # b2
                pl.BlockSpec((out_ch, tc), wmap),      # wh (padded)
                pl.BlockSpec((1, tc), wmap),           # bh (padded)
            ],
            out_specs=pl.BlockSpec((1, n, tc), bmap),
            scratch_shapes=[pltpu.VMEM((n, hc), jnp.float32)],
        ),
        compiler_params=pltpu.CompilerParams(
            dimension_semantics=("parallel",)),
    )(h1p, adj, a1, b1, w2, a2, b2, wh, bh)


# ----------------------------------------------------------------------------
# GAT model (deterministic synthetic parameters)
# ----------------------------------------------------------------------------
class GATPallas:
    def __init__(self, node_classes, embedding_dim=16, hidden_dim=32,
                 num_layers=2, heads=8, key=None):
        assert num_layers == 2, "fused Pallas forward implements the default 2-layer GAT"
        self.node_classes = list(node_classes)
        self.num_nodes = len(node_classes)
        self.embedding_dim = embedding_dim
        self.hidden_dim = hidden_dim
        self.heads = heads
        self.final_dim = hidden_dim
        self.total_c = int(sum(node_classes))

        key = jax.random.PRNGKey(0) if key is None else key
        ks = iter(jax.random.split(key, 64))

        # node embeddings: table i has shape (c_i + 1, embedding_dim)
        emb_tables = [
            0.1 * jax.random.normal(next(ks), (c + 1, embedding_dim), jnp.float32)
            for c in node_classes
        ]

        # layer 0: GATConv(emb -> hidden, heads=H, concat=True)
        w1 = 0.1 * jax.random.normal(next(ks), (embedding_dim, heads * hidden_dim),
                                     jnp.float32)
        att_src1 = 0.1 * jax.random.normal(next(ks), (heads, hidden_dim), jnp.float32)
        att_dst1 = 0.1 * jax.random.normal(next(ks), (heads, hidden_dim), jnp.float32)
        self.b1 = jnp.zeros((1, heads * hidden_dim), jnp.float32)

        # layer 1: GATConv(hidden*H -> hidden, heads=1, concat=False)
        self.w2 = (0.1 * jax.random.normal(next(ks), (heads * hidden_dim, hidden_dim),
                                           jnp.float32)).astype(jnp.bfloat16)
        att_src2 = 0.1 * jax.random.normal(next(ks), (1, hidden_dim), jnp.float32)
        att_dst2 = 0.1 * jax.random.normal(next(ks), (1, hidden_dim), jnp.float32)
        self.b2 = jnp.zeros((1, hidden_dim), jnp.float32)

        # per-node classification heads, stacked column-wise and lane-padded to 128
        head_ws, head_bs, offsets, off = [], [], [], 0
        for c in node_classes:
            wk, bk = jax.random.split(next(ks))
            head_ws.append(0.1 * jax.random.normal(wk, (self.final_dim, c), jnp.float32))
            head_bs.append(0.01 * jax.random.normal(bk, (1, c), jnp.float32))
            offsets.append(off)
            off += c
        wh = jnp.concatenate(head_ws, axis=1)                       # [hidden, total_c]
        bh = jnp.concatenate(head_bs, axis=1)                       # [1, total_c]
        tc_pad = ((self.total_c + 127) // 128) * 128
        self.wh = jnp.pad(wh, ((0, 0), (0, tc_pad - self.total_c))).astype(jnp.bfloat16)
        self.bh = jnp.pad(bh, ((0, 0), (0, tc_pad - self.total_c)))  # f32
        self.head_offsets = offsets

        # ---- host-side precomputation --------------------------------------
        # fold layer-0 lin weight into the embedding tables (then cast bf16):
        # the lookup yields bf16 (x @ W1) directly, MXU-ready.
        self.proj_tables = [(tbl @ w1).astype(jnp.bfloat16) for tbl in emb_tables]

        # block-diagonal attention matrices so all heads' e_src/e_dst come from
        # a single bf16 [n, H*C] x [H*C, 2H] MXU matmul inside the kernel.
        a1 = jnp.zeros((heads * hidden_dim, 2 * heads), jnp.float32)
        for hd in range(heads):
            sl = slice(hd * hidden_dim, (hd + 1) * hidden_dim)
            a1 = a1.at[sl, hd].set(att_src1[hd])
            a1 = a1.at[sl, heads + hd].set(att_dst1[hd])
        self.a1 = a1.astype(jnp.bfloat16)
        self.a2 = jnp.concatenate([att_src2.T, att_dst2.T], axis=1).astype(jnp.bfloat16)

    def __call__(self, x, edge_index):
        """x: (batch*num_nodes, 1) int32, edge_index: (2, E) int32 (PyG disjoint batch)."""
        total = x.shape[0]
        n = self.num_nodes
        batch = total // n
        x = x.reshape(batch, n)

        # per-graph dense adjacency [B, n, n] built DIRECTLY in bf16 host-side
        # (edges are 0/1; adj is only a boolean mask, never an MXU operand).
        # Graphs in a batch are disjoint (PyG batching), so each graph only
        # needs its own [n, n] block.
        src, dst = edge_index[0], edge_index[1]
        b_idx = dst // n
        adj = jnp.zeros((batch, n, n), jnp.bfloat16)
        adj = adj.at[b_idx, dst % n, src % n].set(1.0)
        diag = jnp.arange(n)
        adj = adj.at[:, diag, diag].set(1.0)          # GATConv add_self_loops default

        # embedding lookup (glue) on the PRE-PROJECTED bf16 tables -> [B, n, H*hidden]
        rows = []
        for i, tbl in enumerate(self.proj_tables):
            obs = jnp.clip(x[:, i], 0, self.node_classes[i])
            rows.append(tbl[obs][:, None, :])
        h1p = jnp.concatenate(rows, axis=1)           # [B, n, H*hidden] bf16

        # single fused pallas_call (gridded over the batch): both GATConv layers
        # + all classification heads.
        logits_all = gat_forward(
            h1p, adj, self.a1, self.b1, self.w2, self.a2, self.b2,
            self.wh, self.bh, heads=self.heads, out_ch=self.hidden_dim)

        out = []
        for i, c in enumerate(self.node_classes):
            off = self.head_offsets[i]
            out.append(logits_all[:, i, off:off + c])     # [batch, c_i]
        # TODO(synk): dropout p=0.0 is a no-op; non-zero dropout not implemented.
        return out


# ----------------------------------------------------------------------------
# Example run
# ----------------------------------------------------------------------------
if __name__ == "__main__":
    node_classes = [3, 4, 2, 5]       # 4 nodes, c_i classes each
    num_nodes = len(node_classes)
    batch = 2

    key = jax.random.PRNGKey(0)
    k_model, k_x = jax.random.split(key)

    model = GATPallas(node_classes, embedding_dim=16, hidden_dim=32,
                      num_layers=2, heads=8, key=k_model)

    # discrete node observations, shape (batch*num_nodes, 1)
    cols = []
    xk = jax.random.split(k_x, num_nodes)
    for i, c in enumerate(node_classes):
        cols.append(jax.random.randint(xk[i], (batch,), 0, c + 1, jnp.int32))
    x = jnp.stack(cols, axis=1).reshape(batch * num_nodes, 1)

    # base edge_index (src -> dst) over one graph, replicated per batch item
    # with the PyG per-graph node offset.
    base_edges = jnp.array([[0, 1, 2, 0, 1, 3],     # sources
                            [1, 2, 3, 2, 3, 0]],    # targets
                           dtype=jnp.int32)
    edge_index = jnp.concatenate(
        [base_edges + b * num_nodes for b in range(batch)], axis=1)  # (2, E_total)

    logits = model(x, edge_index)
    logits = [jax.block_until_ready(l) for l in logits]

    # sanity: one logits tensor per node, shape (batch, c_i)
    assert len(logits) == num_nodes
    for l, c in zip(logits, node_classes):
        assert l.shape == (batch, c)
        assert l.dtype == jnp.float32

    print("KERNEL_OK")
</pallas_src>

<mosaic_0001>
module attributes {stable_mosaic.version = 11 : i64} {
  func.func @_gat_fused_kernel(%arg0: i32, %arg1: memref<1x4x256xbf16, #tpu.memory_space<vmem>>, %arg2: memref<1x4x4xbf16, #tpu.memory_space<vmem>>, %arg3: memref<256x16xbf16, #tpu.memory_space<vmem>>, %arg4: memref<1x256xf32, #tpu.memory_space<vmem>>, %arg5: memref<256x32xbf16, #tpu.memory_space<vmem>>, %arg6: memref<32x2xbf16, #tpu.memory_space<vmem>>, %arg7: memref<1x32xf32, #tpu.memory_space<vmem>>, %arg8: memref<32x128xbf16, #tpu.memory_space<vmem>>, %arg9: memref<1x128xf32, #tpu.memory_space<vmem>>, %arg10: memref<1x4x128xf32, #tpu.memory_space<vmem>>, %arg11: memref<4x256xf32, #tpu.memory_space<vmem>>) attributes {dimension_semantics = [#tpu.dimension_semantics<parallel>], iteration_bounds = array<i64: 2>, scalar_prefetch = 0 : i64, scratch_operands = 1 : i64, tpu.core_type = #tpu.core_type<tc>, window_params = [{transform_indices = @transform_0, window_bounds = array<i64: 1, 4, 256>}, {transform_indices = @transform_1, window_bounds = array<i64: 1, 4, 4>}, {pipeline_mode = #tpu.pipeline_mode<synchronous>, transform_indices = @transform_2, window_bounds = array<i64: 256, 16>}, {pipeline_mode = #tpu.pipeline_mode<synchronous>, transform_indices = @transform_3, window_bounds = array<i64: 1, 256>}, {pipeline_mode = #tpu.pipeline_mode<synchronous>, transform_indices = @transform_4, window_bounds = array<i64: 256, 32>}, {pipeline_mode = #tpu.pipeline_mode<synchronous>, transform_indices = @transform_5, window_bounds = array<i64: 32, 2>}, {pipeline_mode = #tpu.pipeline_mode<synchronous>, transform_indices = @transform_6, window_bounds = array<i64: 1, 32>}, {pipeline_mode = #tpu.pipeline_mode<synchronous>, transform_indices = @transform_7, window_bounds = array<i64: 32, 128>}, {pipeline_mode = #tpu.pipeline_mode<synchronous>, transform_indices = @transform_8, window_bounds = array<i64: 1, 128>}, {transform_indices = @transform_9, window_bounds = array<i64: 1, 4, 128>}]} {
    %c0 = arith.constant 0 : index
    %c0_0 = arith.constant 0 : index
    %c0_1 = arith.constant 0 : index
    %0 = vector.load %arg2[%c0, %c0_0, %c0_1] : memref<1x4x4xbf16, #tpu.memory_space<vmem>>, vector<1x4x4xbf16>
    %1 = vector.shape_cast %0 : vector<1x4x4xbf16> to vector<4x4xbf16>
    %cst = arith.constant 0.000000e+00 : bf16
    %2 = vector.broadcast %cst : bf16 to vector<4x4xbf16>
    %3 = arith.cmpf ogt, %1, %2 : vector<4x4xbf16>
    %cst_2 = arith.constant 1.000000e+00 : bf16
    %4 = vector.broadcast %cst_2 : bf16 to vector<4x1xbf16>
    %c0_3 = arith.constant 0 : index
    %c0_4 = arith.constant 0 : index
    %c0_5 = arith.constant 0 : index
    %5 = vector.load %arg1[%c0_3, %c0_4, %c0_5] : memref<1x4x256xbf16, #tpu.memory_space<vmem>>, vector<1x4x256xbf16>
    %6 = vector.shape_cast %5 : vector<1x4x256xbf16> to vector<4x256xbf16>
    %c0_6 = arith.constant 0 : index
    %c0_7 = arith.constant 0 : index
    %7 = vector.load %arg3[%c0_6, %c0_7] : memref<256x16xbf16, #tpu.memory_space<vmem>>, vector<256x16xbf16>
    %cst_8 = arith.constant dense<0.000000e+00> : vector<4x16xf32>
    %8 = tpu.matmul %6, %7, %cst_8 {dimension_numbers = #tpu.dot_dimension_numbers<[1], [0], [0], [1], [0, 0, 1, 1], [], []>} : vector<4x256xbf16>, vector<256x16xbf16>, vector<4x16xf32> -> vector<4x16xf32>
    %9 = vector.extract_strided_slice %8 {offsets = [0, 0], sizes = [4, 8], strides = [1, 1]} : vector<4x16xf32> to vector<4x8xf32>
    %10 = vector.extract_strided_slice %8 {offsets = [0, 8], sizes = [4, 8], strides = [1, 1]} : vector<4x16xf32> to vector<4x8xf32>
    %11 = tpu.transpose %9, [1, 0] : vector<4x8xf32> -> vector<8x4xf32>
    %12 = vector.extract_strided_slice %6 {offsets = [0, 0], sizes = [4, 32], strides = [1, 1]} : vector<4x256xbf16> to vector<4x32xbf16>
    %13 = tpu.concatenate %12, %4 in 1 : vector<4x32xbf16>, vector<4x1xbf16> -> vector<4x33xbf16>
    %14 = vector.extract_strided_slice %10 {offsets = [0, 0], sizes = [4, 1], strides = [1, 1]} : vector<4x8xf32> to vector<4x1xf32>
    %15 = vector.extract_strided_slice %11 {offsets = [0, 0], sizes = [1, 4], strides = [1, 1]} : vector<8x4xf32> to vector<1x4xf32>
    %16 = vector.broadcast %14 : vector<4x1xf32> to vector<4x4xf32>
    %17 = vector.broadcast %15 : vector<1x4xf32> to vector<4x4xf32>
    %18 = arith.addf %16, %17 : vector<4x4xf32>
    %cst_9 = arith.constant 0.000000e+00 : f32
    %19 = vector.broadcast %cst_9 : f32 to vector<4x4xf32>
    %20 = arith.cmpf ogt, %18, %19 : vector<4x4xf32>
    %cst_10 = arith.constant 2.000000e-01 : f32
    %21 = vector.broadcast %cst_10 : f32 to vector<4x4xf32>
    %22 = arith.mulf %21, %18 : vector<4x4xf32>
    %23 = arith.select %20, %18, %22 : vector<4x4xi1>, vector<4x4xf32>
    %cst_11 = arith.constant -1.000000e+30 : f32
    %24 = vector.broadcast %cst_11 : f32 to vector<4x4xf32>
    %25 = arith.select %3, %23, %24 : vector<4x4xi1>, vector<4x4xf32>
    %cst_12 = arith.constant dense<0xFF800000> : vector<4xf32>
    %26 = vector.multi_reduction <maximumf>, %25, %cst_12 [1] : vector<4x4xf32> to vector<4xf32>
    %27 = vector.shape_cast %26 : vector<4xf32> to vector<4x1xf32>
    %28 = vector.broadcast %27 : vector<4x1xf32> to vector<4x4xf32>
    %29 = arith.subf %25, %28 : vector<4x4xf32>
    %30 = math.exp %29 : vector<4x4xf32>
    %31 = arith.truncf %30 : vector<4x4xf32> to vector<4x4xbf16>
    %cst_13 = arith.constant dense<0.000000e+00> : vector<4x33xf32>
    %32 = tpu.matmul %31, %13, %cst_13 {dimension_numbers = #tpu.dot_dimension_numbers<[1], [0], [0], [1], [0, 0, 1, 1], [], []>} : vector<4x4xbf16>, vector<4x33xbf16>, vector<4x33xf32> -> vector<4x33xf32>
    %33 = vector.extract_strided_slice %32 {offsets = [0, 0], sizes = [4, 32], strides = [1, 1]} : vector<4x33xf32> to vector<4x32xf32>
    %34 = vector.extract_strided_slice %32 {offsets = [0, 32], sizes = [4, 1], strides = [1, 1]} : vector<4x33xf32> to vector<4x1xf32>
    %35 = tpu.reciprocal %34 {approx = true} : vector<4x1xf32> -> vector<4x1xf32>
    %36 = vector.broadcast %35 : vector<4x1xf32> to vector<4x32xf32>
    %37 = arith.mulf %33, %36 : vector<4x32xf32>
    %c0_14 = arith.constant 0 : index
    %c0_15 = arith.constant 0 : index
    %38 = vector.load %arg11[%c0_14, %c0_15] : memref<4x256xf32, #tpu.memory_space<vmem>>, vector<4x32xf32>
    tpu.vector_store %arg11[%c0_14, %c0_15], %37 {strides = array<i32>} : memref<4x256xf32, #tpu.memory_space<vmem>>, vector<4x32xf32>,
    %39 = vector.extract_strided_slice %6 {offsets = [0, 32], sizes = [4, 32], strides = [1, 1]} : vector<4x256xbf16> to vector<4x32xbf16>
    %40 = tpu.concatenate %39, %4 in 1 : vector<4x32xbf16>, vector<4x1xbf16> -> vector<4x33xbf16>
    %41 = vector.extract_strided_slice %10 {offsets = [0, 1], sizes = [4, 1], strides = [1, 1]} : vector<4x8xf32> to vector<4x1xf32>
    %42 = vector.extract_strided_slice %11 {offsets = [1, 0], sizes = [1, 4], strides = [1, 1]} : vector<8x4xf32> to vector<1x4xf32>
    %43 = vector.broadcast %41 : vector<4x1xf32> to vector<4x4xf32>
    %44 = vector.broadcast %42 : vector<1x4xf32> to vector<4x4xf32>
    %45 = arith.addf %43, %44 : vector<4x4xf32>
    %cst_16 = arith.constant 0.000000e+00 : f32
    %46 = vector.broadcast %cst_16 : f32 to vector<4x4xf32>
    %47 = arith.cmpf ogt, %45, %46 : vector<4x4xf32>
    %cst_17 = arith.constant 2.000000e-01 : f32
    %48 = vector.broadcast %cst_17 : f32 to vector<4x4xf32>
    %49 = arith.mulf %48, %45 : vector<4x4xf32>
    %50 = arith.select %47, %45, %49 : vector<4x4xi1>, vector<4x4xf32>
    %cst_18 = arith.constant -1.000000e+30 : f32
    %51 = vector.broadcast %cst_18 : f32 to vector<4x4xf32>
    %52 = arith.select %3, %50, %51 : vector<4x4xi1>, vector<4x4xf32>
    %cst_19 = arith.constant dense<0xFF800000> : vector<4xf32>
    %53 = vector.multi_reduction <maximumf>, %52, %cst_19 [1] : vector<4x4xf32> to vector<4xf32>
    %54 = vector.shape_cast %53 : vector<4xf32> to vector<4x1xf32>
    %55 = vector.broadcast %54 : vector<4x1xf32> to vector<4x4xf32>
    %56 = arith.subf %52, %55 : vector<4x4xf32>
    %57 = math.exp %56 : vector<4x4xf32>
    %58 = arith.truncf %57 : vector<4x4xf32> to vector<4x4xbf16>
    %cst_20 = arith.constant dense<0.000000e+00> : vector<4x33xf32>
    %59 = tpu.matmul %58, %40, %cst_20 {dimension_numbers = #tpu.dot_dimension_numbers<[1], [0], [0], [1], [0, 0, 1, 1], [], []>} : vector<4x4xbf16>, vector<4x33xbf16>, vector<4x33xf32> -> vector<4x33xf32>
    %60 = vector.extract_strided_slice %59 {offsets = [0, 0], sizes = [4, 32], strides = [1, 1]} : vector<4x33xf32> to vector<4x32xf32>
    %61 = vector.extract_strided_slice %59 {offsets = [0, 32], sizes = [4, 1], strides = [1, 1]} : vector<4x33xf32> to vector<4x1xf32>
    %62 = tpu.reciprocal %61 {approx = true} : vector<4x1xf32> -> vector<4x1xf32>
    %63 = vector.broadcast %62 : vector<4x1xf32> to vector<4x32xf32>
    %64 = arith.mulf %60, %63 : vector<4x32xf32>
    %c0_21 = arith.constant 0 : index
    %c32 = arith.constant 32 : index
    %65 = vector.load %arg11[%c0_21, %c32] : memref<4x256xf32, #tpu.memory_space<vmem>>, vector<4x32xf32>
    tpu.vector_store %arg11[%c0_21, %c32], %64 {strides = array<i32>} : memref<4x256xf32, #tpu.memory_space<vmem>>, vector<4x32xf32>,
    %66 = vector.extract_strided_slice %6 {offsets = [0, 64], sizes = [4, 32], strides = [1, 1]} : vector<4x256xbf16> to vector<4x32xbf16>
    %67 = tpu.concatenate %66, %4 in 1 : vector<4x32xbf16>, vector<4x1xbf16> -> vector<4x33xbf16>
    %68 = vector.extract_strided_slice %10 {offsets = [0, 2], sizes = [4, 1], strides = [1, 1]} : vector<4x8xf32> to vector<4x1xf32>
    %69 = vector.extract_strided_slice %11 {offsets = [2, 0], sizes = [1, 4], strides = [1, 1]} : vector<8x4xf32> to vector<1x4xf32>
    %70 = vector.broadcast %68 : vector<4x1xf32> to vector<4x4xf32>
    %71 = vector.broadcast %69 : vector<1x4xf32> to vector<4x4xf32>
    %72 = arith.addf %70, %71 : vector<4x4xf32>
    %cst_22 = arith.constant 0.000000e+00 : f32
    %73 = vector.broadcast %cst_22 : f32 to vector<4x4xf32>
    %74 = arith.cmpf ogt, %72, %73 : vector<4x4xf32>
    %cst_23 = arith.constant 2.000000e-01 : f32
    %75 = vector.broadcast %cst_23 : f32 to vector<4x4xf32>
    %76 = arith.mulf %75, %72 : vector<4x4xf32>
    %77 = arith.select %74, %72, %76 : vector<4x4xi1>, vector<4x4xf32>
    %cst_24 = arith.constant -1.000000e+30 : f32
    %78 = vector.broadcast %cst_24 : f32 to vector<4x4xf32>
    %79 = arith.select %3, %77, %78 : vector<4x4xi1>, vector<4x4xf32>
    %cst_25 = arith.constant dense<0xFF800000> : vector<4xf32>
    %80 = vector.multi_reduction <maximumf>, %79, %cst_25 [1] : vector<4x4xf32> to vector<4xf32>
    %81 = vector.shape_cast %80 : vector<4xf32> to vector<4x1xf32>
    %82 = vector.broadcast %81 : vector<4x1xf32> to vector<4x4xf32>
    %83 = arith.subf %79, %82 : vector<4x4xf32>
    %84 = math.exp %83 : vector<4x4xf32>
    %85 = arith.truncf %84 : vector<4x4xf32> to vector<4x4xbf16>
    %cst_26 = arith.constant dense<0.000000e+00> : vector<4x33xf32>
    %86 = tpu.matmul %85, %67, %cst_26 {dimension_numbers = #tpu.dot_dimension_numbers<[1], [0], [0], [1], [0, 0, 1, 1], [], []>} : vector<4x4xbf16>, vector<4x33xbf16>, vector<4x33xf32> -> vector<4x33xf32>
    %87 = vector.extract_strided_slice %86 {offsets = [0, 0], sizes = [4, 32], strides = [1, 1]} : vector<4x33xf32> to vector<4x32xf32>
    %88 = vector.extract_strided_slice %86 {offsets = [0, 32], sizes = [4, 1], strides = [1, 1]} : vector<4x33xf32> to vector<4x1xf32>
    %89 = tpu.reciprocal %88 {approx = true} : vector<4x1xf32> -> vector<4x1xf32>
    %90 = vector.broadcast %89 : vector<4x1xf32> to vector<4x32xf32>
    %91 = arith.mulf %87, %90 : vector<4x32xf32>
    %c0_27 = arith.constant 0 : index
    %c64 = arith.constant 64 : index
    %92 = vector.load %arg11[%c0_27, %c64] : memref<4x256xf32, #tpu.memory_space<vmem>>, vector<4x32xf32>
    tpu.vector_store %arg11[%c0_27, %c64], %91 {strides = array<i32>} : memref<4x256xf32, #tpu.memory_space<vmem>>, vector<4x32xf32>,
    %93 = vector.extract_strided_slice %6 {offsets = [0, 96], sizes = [4, 32], strides = [1, 1]} : vector<4x256xbf16> to vector<4x32xbf16>
    %94 = tpu.concatenate %93, %4 in 1 : vector<4x32xbf16>, vector<4x1xbf16> -> vector<4x33xbf16>
    %95 = vector.extract_strided_slice %10 {offsets = [0, 3], sizes = [4, 1], strides = [1, 1]} : vector<4x8xf32> to vector<4x1xf32>
    %96 = vector.extract_strided_slice %11 {offsets = [3, 0], sizes = [1, 4], strides = [1, 1]} : vector<8x4xf32> to vector<1x4xf32>
    %97 = vector.broadcast %95 : vector<4x1xf32> to vector<4x4xf32>
    %98 = vector.broadcast %96 : vector<1x4xf32> to vector<4x4xf32>
    %99 = arith.addf %97, %98 : vector<4x4xf32>
    %cst_28 = arith.constant 0.000000e+00 : f32
    %100 = vector.broadcast %cst_28 : f32 to vector<4x4xf32>
    %101 = arith.cmpf ogt, %99, %100 : vector<4x4xf32>
    %cst_29 = arith.constant 2.000000e-01 : f32
    %102 = vector.broadcast %cst_29 : f32 to vector<4x4xf32>
    %103 = arith.mulf %102, %99 : vector<4x4xf32>
    %104 = arith.select %101, %99, %103 : vector<4x4xi1>, vector<4x4xf32>
    %cst_30 = arith.constant -1.000000e+30 : f32
    %105 = vector.broadcast %cst_30 : f32 to vector<4x4xf32>
    %106 = arith.select %3, %104, %105 : vector<4x4xi1>, vector<4x4xf32>
    %cst_31 = arith.constant dense<0xFF800000> : vector<4xf32>
    %107 = vector.multi_reduction <maximumf>, %106, %cst_31 [1] : vector<4x4xf32> to vector<4xf32>
    %108 = vector.shape_cast %107 : vector<4xf32> to vector<4x1xf32>
    %109 = vector.broadcast %108 : vector<4x1xf32> to vector<4x4xf32>
    %110 = arith.subf %106, %109 : vector<4x4xf32>
    %111 = math.exp %110 : vector<4x4xf32>
    %112 = arith.truncf %111 : vector<4x4xf32> to vector<4x4xbf16>
    %cst_32 = arith.constant dense<0.000000e+00> : vector<4x33xf32>
    %113 = tpu.matmul %112, %94, %cst_32 {dimension_numbers = #tpu.dot_dimension_numbers<[1], [0], [0], [1], [0, 0, 1, 1], [], []>} : vector<4x4xbf16>, vector<4x33xbf16>, vector<4x33xf32> -> vector<4x33xf32>
    %114 = vector.extract_strided_slice %113 {offsets = [0, 0], sizes = [4, 32], strides = [1, 1]} : vector<4x33xf32> to vector<4x32xf32>
    %115 = vector.extract_strided_slice %113 {offsets = [0, 32], sizes = [4, 1], strides = [1, 1]} : vector<4x33xf32> to vector<4x1xf32>
    %116 = tpu.reciprocal %115 {approx = true} : vector<4x1xf32> -> vector<4x1xf32>
    %117 = vector.broadcast %116 : vector<4x1xf32> to vector<4x32xf32>
    %118 = arith.mulf %114, %117 : vector<4x32xf32>
    %c0_33 = arith.constant 0 : index
    %c96 = arith.constant 96 : index
    %119 = vector.load %arg11[%c0_33, %c96] : memref<4x256xf32, #tpu.memory_space<vmem>>, vector<4x32xf32>
    tpu.vector_store %arg11[%c0_33, %c96], %118 {strides = array<i32>} : memref<4x256xf32, #tpu.memory_space<vmem>>, vector<4x32xf32>,
    %120 = vector.extract_strided_slice %6 {offsets = [0, 128], sizes = [4, 32], strides = [1, 1]} : vector<4x256xbf16> to vector<4x32xbf16>
    %121 = tpu.concatenate %120, %4 in 1 : vector<4x32xbf16>, vector<4x1xbf16> -> vector<4x33xbf16>
    %122 = vector.extract_strided_slice %10 {offsets = [0, 4], sizes = [4, 1], strides = [1, 1]} : vector<4x8xf32> to vector<4x1xf32>
    %123 = vector.extract_strided_slice %11 {offsets = [4, 0], sizes = [1, 4], strides = [1, 1]} : vector<8x4xf32> to vector<1x4xf32>
    %124 = vector.broadcast %122 : vector<4x1xf32> to vector<4x4xf32>
    %125 = vector.broadcast %123 : vector<1x4xf32> to vector<4x4xf32>
    %126 = arith.addf %124, %125 : vector<4x4xf32>
    %cst_34 = arith.constant 0.000000e+00 : f32
    %127 = vector.broadcast %cst_34 : f32 to vector<4x4xf32>
    %128 = arith.cmpf ogt, %126, %127 : vector<4x4xf32>
    %cst_35 = arith.constant 2.000000e-01 : f32
    %129 = vector.broadcast %cst_35 : f32 to vector<4x4xf32>
    %130 = arith.mulf %129, %126 : vector<4x4xf32>
    %131 = arith.select %128, %126, %130 : vector<4x4xi1>, vector<4x4xf32>
    %cst_36 = arith.constant -1.000000e+30 : f32
    %132 = vector.broadcast %cst_36 : f32 to vector<4x4xf32>
    %133 = arith.select %3, %131, %132 : vector<4x4xi1>, vector<4x4xf32>
    %cst_37 = arith.constant dense<0xFF800000> : vector<4xf32>
    %134 = vector.multi_reduction <maximumf>, %133, %cst_37 [1] : vector<4x4xf32> to vector<4xf32>
    %135 = vector.shape_cast %134 : vector<4xf32> to vector<4x1xf32>
    %136 = vector.broadcast %135 : vector<4x1xf32> to vector<4x4xf32>
    %137 = arith.subf %133, %136 : vector<4x4xf32>
    %138 = math.exp %137 : vector<4x4xf32>
    %139 = arith.truncf %138 : vector<4x4xf32> to vector<4x4xbf16>
    %cst_38 = arith.constant dense<0.000000e+00> : vector<4x33xf32>
    %140 = tpu.matmul %139, %121, %cst_38 {dimension_numbers = #tpu.dot_dimension_numbers<[1], [0], [0], [1], [0, 0, 1, 1], [], []>} : vector<4x4xbf16>, vector<4x33xbf16>, vector<4x33xf32> -> vector<4x33xf32>
    %141 = vector.extract_strided_slice %140 {offsets = [0, 0], sizes = [4, 32], strides = [1, 1]} : vector<4x33xf32> to vector<4x32xf32>
    %142 = vector.extract_strided_slice %140 {offsets = [0, 32], sizes = [4, 1], strides = [1, 1]} : vector<4x33xf32> to vector<4x1xf32>
    %143 = tpu.reciprocal %142 {approx = true} : vector<4x1xf32> -> vector<4x1xf32>
    %144 = vector.broadcast %143 : vector<4x1xf32> to vector<4x32xf32>
    %145 = arith.mulf %141, %144 : vector<4x32xf32>
    %c0_39 = arith.constant 0 : index
    %c128 = arith.constant 128 : index
    %146 = vector.load %arg11[%c0_39, %c128] : memref<4x256xf32, #tpu.memory_space<vmem>>, vector<4x32xf32>
    tpu.vector_store %arg11[%c0_39, %c128], %145 {strides = array<i32>} : memref<4x256xf32, #tpu.memory_space<vmem>>, vector<4x32xf32>,
    %147 = vector.extract_strided_slice %6 {offsets = [0, 160], sizes = [4, 32], strides = [1, 1]} : vector<4x256xbf16> to vector<4x32xbf16>
    %148 = tpu.concatenate %147, %4 in 1 : vector<4x32xbf16>, vector<4x1xbf16> -> vector<4x33xbf16>
    %149 = vector.extract_strided_slice %10 {offsets = [0, 5], sizes = [4, 1], strides = [1, 1]} : vector<4x8xf32> to vector<4x1xf32>
    %150 = vector.extract_strided_slice %11 {offsets = [5, 0], sizes = [1, 4], strides = [1, 1]} : vector<8x4xf32> to vector<1x4xf32>
    %151 = vector.broadcast %149 : vector<4x1xf32> to vector<4x4xf32>
    %152 = vector.broadcast %150 : vector<1x4xf32> to vector<4x4xf32>
    %153 = arith.addf %151, %152 : vector<4x4xf32>
    %cst_40 = arith.constant 0.000000e+00 : f32
    %154 = vector.broadcast %cst_40 : f32 to vector<4x4xf32>
    %155 = arith.cmpf ogt, %153, %154 : vector<4x4xf32>
    %cst_41 = arith.constant 2.000000e-01 : f32
    %156 = vector.broadcast %cst_41 : f32 to vector<4x4xf32>
    %157 = arith.mulf %156, %153 : vector<4x4xf32>
    %158 = arith.select %155, %153, %157 : vector<4x4xi1>, vector<4x4xf32>
    %cst_42 = arith.constant -1.000000e+30 : f32
    %159 = vector.broadcast %cst_42 : f32 to vector<4x4xf32>
    %160 = arith.select %3, %158, %159 : vector<4x4xi1>, vector<4x4xf32>
    %cst_43 = arith.constant dense<0xFF800000> : vector<4xf32>
    %161 = vector.multi_reduction <maximumf>, %160, %cst_43 [1] : vector<4x4xf32> to vector<4xf32>
    %162 = vector.shape_cast %161 : vector<4xf32> to vector<4x1xf32>
    %163 = vector.broadcast %162 : vector<4x1xf32> to vector<4x4xf32>
    %164 = arith.subf %160, %163 : vector<4x4xf32>
    %165 = math.exp %164 : vector<4x4xf32>
    %166 = arith.truncf %165 : vector<4x4xf32> to vector<4x4xbf16>
    %cst_44 = arith.constant dense<0.000000e+00> : vector<4x33xf32>
    %167 = tpu.matmul %166, %148, %cst_44 {dimension_numbers = #tpu.dot_dimension_numbers<[1], [0], [0], [1], [0, 0, 1, 1], [], []>} : vector<4x4xbf16>, vector<4x33xbf16>, vector<4x33xf32> -> vector<4x33xf32>
    %168 = vector.extract_strided_slice %167 {offsets = [0, 0], sizes = [4, 32], strides = [1, 1]} : vector<4x33xf32> to vector<4x32xf32>
    %169 = vector.extract_strided_slice %167 {offsets = [0, 32], sizes = [4, 1], strides = [1, 1]} : vector<4x33xf32> to vector<4x1xf32>
    %170 = tpu.reciprocal %169 {approx = true} : vector<4x1xf32> -> vector<4x1xf32>
    %171 = vector.broadcast %170 : vector<4x1xf32> to vector<4x32xf32>
    %172 = arith.mulf %168, %171 : vector<4x32xf32>
    %c0_45 = arith.constant 0 : index
    %c160 = arith.constant 160 : index
    %173 = vector.load %arg11[%c0_45, %c160] : memref<4x256xf32, #tpu.memory_space<vmem>>, vector<4x32xf32>
    tpu.vector_store %arg11[%c0_45, %c160], %172 {strides = array<i32>} : memref<4x256xf32, #tpu.memory_space<vmem>>, vector<4x32xf32>,
    %174 = vector.extract_strided_slice %6 {offsets = [0, 192], sizes = [4, 32], strides = [1, 1]} : vector<4x256xbf16> to vector<4x32xbf16>
    %175 = tpu.concatenate %174, %4 in 1 : vector<4x32xbf16>, vector<4x1xbf16> -> vector<4x33xbf16>
    %176 = vector.extract_strided_slice %10 {offsets = [0, 6], sizes = [4, 1], strides = [1, 1]} : vector<4x8xf32> to vector<4x1xf32>
    %177 = vector.extract_strided_slice %11 {offsets = [6, 0], sizes = [1, 4], strides = [1, 1]} : vector<8x4xf32> to vector<1x4xf32>
    %178 = vector.broadcast %176 : vector<4x1xf32> to vector<4x4xf32>
    %179 = vector.broadcast %177 : vector<1x4xf32> to vector<4x4xf32>
    %180 = arith.addf %178, %179 : vector<4x4xf32>
    %cst_46 = arith.constant 0.000000e+00 : f32
    %181 = vector.broadcast %cst_46 : f32 to vector<4x4xf32>
    %182 = arith.cmpf ogt, %180, %181 : vector<4x4xf32>
    %cst_47 = arith.constant 2.000000e-01 : f32
    %183 = vector.broadcast %cst_47 : f32 to vector<4x4xf32>
    %184 = arith.mulf %183, %180 : vector<4x4xf32>
    %185 = arith.select %182, %180, %184 : vector<4x4xi1>, vector<4x4xf32>
    %cst_48 = arith.constant -1.000000e+30 : f32
    %186 = vector.broadcast %cst_48 : f32 to vector<4x4xf32>
    %187 = arith.select %3, %185, %186 : vector<4x4xi1>, vector<4x4xf32>
    %cst_49 = arith.constant dense<0xFF800000> : vector<4xf32>
    %188 = vector.multi_reduction <maximumf>, %187, %cst_49 [1] : vector<4x4xf32> to vector<4xf32>
    %189 = vector.shape_cast %188 : vector<4xf32> to vector<4x1xf32>
    %190 = vector.broadcast %189 : vector<4x1xf32> to vector<4x4xf32>
    %191 = arith.subf %187, %190 : vector<4x4xf32>
    %192 = math.exp %191 : vector<4x4xf32>
    %193 = arith.truncf %192 : vector<4x4xf32> to vector<4x4xbf16>
    %cst_50 = arith.constant dense<0.000000e+00> : vector<4x33xf32>
    %194 = tpu.matmul %193, %175, %cst_50 {dimension_numbers = #tpu.dot_dimension_numbers<[1], [0], [0], [1], [0, 0, 1, 1], [], []>} : vector<4x4xbf16>, vector<4x33xbf16>, vector<4x33xf32> -> vector<4x33xf32>
    %195 = vector.extract_strided_slice %194 {offsets = [0, 0], sizes = [4, 32], strides = [1, 1]} : vector<4x33xf32> to vector<4x32xf32>
    %196 = vector.extract_strided_slice %194 {offsets = [0, 32], sizes = [4, 1], strides = [1, 1]} : vector<4x33xf32> to vector<4x1xf32>
    %197 = tpu.reciprocal %196 {approx = true} : vector<4x1xf32> -> vector<4x1xf32>
    %198 = vector.broadcast %197 : vector<4x1xf32> to vector<4x32xf32>
    %199 = arith.mulf %195, %198 : vector<4x32xf32>
    %c0_51 = arith.constant 0 : index
    %c192 = arith.constant 192 : index
    %200 = vector.load %arg11[%c0_51, %c192] : memref<4x256xf32, #tpu.memory_space<vmem>>, vector<4x32xf32>
    tpu.vector_store %arg11[%c0_51, %c192], %199 {strides = array<i32>} : memref<4x256xf32, #tpu.memory_space<vmem>>, vector<4x32xf32>,
    %201 = vector.extract_strided_slice %6 {offsets = [0, 224], sizes = [4, 32], strides = [1, 1]} : vector<4x256xbf16> to vector<4x32xbf16>
    %202 = tpu.concatenate %201, %4 in 1 : vector<4x32xbf16>, vector<4x1xbf16> -> vector<4x33xbf16>
    %203 = vector.extract_strided_slice %10 {offsets = [0, 7], sizes = [4, 1], strides = [1, 1]} : vector<4x8xf32> to vector<4x1xf32>
    %204 = vector.extract_strided_slice %11 {offsets = [7, 0], sizes = [1, 4], strides = [1, 1]} : vector<8x4xf32> to vector<1x4xf32>
    %205 = vector.broadcast %203 : vector<4x1xf32> to vector<4x4xf32>
    %206 = vector.broadcast %204 : vector<1x4xf32> to vector<4x4xf32>
    %207 = arith.addf %205, %206 : vector<4x4xf32>
    %cst_52 = arith.constant 0.000000e+00 : f32
    %208 = vector.broadcast %cst_52 : f32 to vector<4x4xf32>
    %209 = arith.cmpf ogt, %207, %208 : vector<4x4xf32>
    %cst_53 = arith.constant 2.000000e-01 : f32
    %210 = vector.broadcast %cst_53 : f32 to vector<4x4xf32>
    %211 = arith.mulf %210, %207 : vector<4x4xf32>
    %212 = arith.select %209, %207, %211 : vector<4x4xi1>, vector<4x4xf32>
    %cst_54 = arith.constant -1.000000e+30 : f32
    %213 = vector.broadcast %cst_54 : f32 to vector<4x4xf32>
    %214 = arith.select %3, %212, %213 : vector<4x4xi1>, vector<4x4xf32>
    %cst_55 = arith.constant dense<0xFF800000> : vector<4xf32>
    %215 = vector.multi_reduction <maximumf>, %214, %cst_55 [1] : vector<4x4xf32> to vector<4xf32>
    %216 = vector.shape_cast %215 : vector<4xf32> to vector<4x1xf32>
    %217 = vector.broadcast %216 : vector<4x1xf32> to vector<4x4xf32>
    %218 = arith.subf %214, %217 : vector<4x4xf32>
    %219 = math.exp %218 : vector<4x4xf32>
    %220 = arith.truncf %219 : vector<4x4xf32> to vector<4x4xbf16>
    %cst_56 = arith.constant dense<0.000000e+00> : vector<4x33xf32>
    %221 = tpu.matmul %220, %202, %cst_56 {dimension_numbers = #tpu.dot_dimension_numbers<[1], [0], [0], [1], [0, 0, 1, 1], [], []>} : vector<4x4xbf16>, vector<4x33xbf16>, vector<4x33xf32> -> vector<4x33xf32>
    %222 = vector.extract_strided_slice %221 {offsets = [0, 0], sizes = [4, 32], strides = [1, 1]} : vector<4x33xf32> to vector<4x32xf32>
    %223 = vector.extract_strided_slice %221 {offsets = [0, 32], sizes = [4, 1], strides = [1, 1]} : vector<4x33xf32> to vector<4x1xf32>
    %224 = tpu.reciprocal %223 {approx = true} : vector<4x1xf32> -> vector<4x1xf32>
    %225 = vector.broadcast %224 : vector<4x1xf32> to vector<4x32xf32>
    %226 = arith.mulf %222, %225 : vector<4x32xf32>
    %c0_57 = arith.constant 0 : index
    %c224 = arith.constant 224 : index
    %227 = vector.load %arg11[%c0_57, %c224] : memref<4x256xf32, #tpu.memory_space<vmem>>, vector<4x32xf32>
    tpu.vector_store %arg11[%c0_57, %c224], %226 {strides = array<i32>} : memref<4x256xf32, #tpu.memory_space<vmem>>, vector<4x32xf32>,
    %c0_58 = arith.constant 0 : index
    %c0_59 = arith.constant 0 : index
    %228 = vector.load %arg11[%c0_58, %c0_59] : memref<4x256xf32, #tpu.memory_space<vmem>>, vector<4x256xf32>
    %c0_60 = arith.constant 0 : index
    %c0_61 = arith.constant 0 : index
    %229 = vector.load %arg4[%c0_60, %c0_61] : memref<1x256xf32, #tpu.memory_space<vmem>>, vector<1x256xf32>
    %230 = vector.broadcast %229 : vector<1x256xf32> to vector<4x256xf32>
    %231 = arith.addf %228, %230 : vector<4x256xf32>
    %cst_62 = arith.constant 0.000000e+00 : f32
    %232 = vector.broadcast %cst_62 : f32 to vector<4x256xf32>
    %233 = arith.maximumf %231, %232 : vector<4x256xf32>
    %234 = arith.truncf %233 : vector<4x256xf32> to vector<4x256xbf16>
    %c0_63 = arith.constant 0 : index
    %c0_64 = arith.constant 0 : index
    %235 = vector.load %arg5[%c0_63, %c0_64] : memref<256x32xbf16, #tpu.memory_space<vmem>>, vector<256x32xbf16>
    %cst_65 = arith.constant dense<0.000000e+00> : vector<4x32xf32>
    %236 = tpu.matmul %234, %235, %cst_65 {dimension_numbers = #tpu.dot_dimension_numbers<[1], [0], [0], [1], [0, 0, 1, 1], [], []>} : vector<4x256xbf16>, vector<256x32xbf16>, vector<4x32xf32> -> vector<4x32xf32>
    %237 = arith.truncf %236 : vector<4x32xf32> to vector<4x32xbf16>
    %c0_66 = arith.constant 0 : index
    %c0_67 = arith.constant 0 : index
    %238 = vector.load %arg6[%c0_66, %c0_67] : memref<32x2xbf16, #tpu.memory_space<vmem>>, vector<32x2xbf16>
    %cst_68 = arith.constant dense<0.000000e+00> : vector<4x2xf32>
    %239 = tpu.matmul %237, %238, %cst_68 {dimension_numbers = #tpu.dot_dimension_numbers<[1], [0], [0], [1], [0, 0, 1, 1], [], []>} : vector<4x32xbf16>, vector<32x2xbf16>, vector<4x2xf32> -> vector<4x2xf32>
    %240 = vector.extract_strided_slice %239 {offsets = [0, 1], sizes = [4, 1], strides = [1, 1]} : vector<4x2xf32> to vector<4x1xf32>
    %241 = vector.extract_strided_slice %239 {offsets = [0, 0], sizes = [4, 1], strides = [1, 1]} : vector<4x2xf32> to vector<4x1xf32>
    %242 = tpu.transpose %241, [1, 0] : vector<4x1xf32> -> vector<1x4xf32>
    %243 = vector.broadcast %240 : vector<4x1xf32> to vector<4x4xf32>
    %244 = vector.broadcast %242 : vector<1x4xf32> to vector<4x4xf32>
    %245 = arith.addf %243, %244 : vector<4x4xf32>
    %cst_69 = arith.constant 0.000000e+00 : f32
    %246 = vector.broadcast %cst_69 : f32 to vector<4x4xf32>
    %247 = arith.cmpf ogt, %245, %246 : vector<4x4xf32>
    %cst_70 = arith.constant 2.000000e-01 : f32
    %248 = vector.broadcast %cst_70 : f32 to vector<4x4xf32>
    %249 = arith.mulf %248, %245 : vector<4x4xf32>
    %250 = arith.select %247, %245, %249 : vector<4x4xi1>, vector<4x4xf32>
    %cst_71 = arith.constant -1.000000e+30 : f32
    %251 = vector.broadcast %cst_71 : f32 to vector<4x4xf32>
    %252 = arith.select %3, %250, %251 : vector<4x4xi1>, vector<4x4xf32>
    %cst_72 = arith.constant dense<0xFF800000> : vector<4xf32>
    %253 = vector.multi_reduction <maximumf>, %252, %cst_72 [1] : vector<4x4xf32> to vector<4xf32>
    %254 = vector.shape_cast %253 : vector<4xf32> to vector<4x1xf32>
    %255 = vector.broadcast %254 : vector<4x1xf32> to vector<4x4xf32>
    %256 = arith.subf %252, %255 : vector<4x4xf32>
    %257 = math.exp %256 : vector<4x4xf32>
    %258 = arith.truncf %257 : vector<4x4xf32> to vector<4x4xbf16>
    %259 = tpu.concatenate %237, %4 in 1 : vector<4x32xbf16>, vector<4x1xbf16> -> vector<4x33xbf16>
    %cst_73 = arith.constant dense<0.000000e+00> : vector<4x33xf32>
    %260 = tpu.matmul %258, %259, %cst_73 {dimension_numbers = #tpu.dot_dimension_numbers<[1], [0], [0], [1], [0, 0, 1, 1], [], []>} : vector<4x4xbf16>, vector<4x33xbf16>, vector<4x33xf32> -> vector<4x33xf32>
    %261 = vector.extract_strided_slice %260 {offsets = [0, 0], sizes = [4, 32], strides = [1, 1]} : vector<4x33xf32> to vector<4x32xf32>
    %262 = vector.extract_strided_slice %260 {offsets = [0, 32], sizes = [4, 1], strides = [1, 1]} : vector<4x33xf32> to vector<4x1xf32>
    %263 = tpu.reciprocal %262 {approx = true} : vector<4x1xf32> -> vector<4x1xf32>
    %264 = vector.broadcast %263 : vector<4x1xf32> to vector<4x32xf32>
    %265 = arith.mulf %261, %264 : vector<4x32xf32>
    %c0_74 = arith.constant 0 : index
    %c0_75 = arith.constant 0 : index
    %266 = vector.load %arg7[%c0_74, %c0_75] : memref<1x32xf32, #tpu.memory_space<vmem>>, vector<1x32xf32>
    %267 = vector.broadcast %266 : vector<1x32xf32> to vector<4x32xf32>
    %268 = arith.addf %265, %267 : vector<4x32xf32>
    %269 = arith.truncf %268 : vector<4x32xf32> to vector<4x32xbf16>
    %c0_76 = arith.constant 0 : index
    %c0_77 = arith.constant 0 : index
    %270 = vector.load %arg8[%c0_76, %c0_77] : memref<32x128xbf16, #tpu.memory_space<vmem>>, vector<32x128xbf16>
    %cst_78 = arith.constant dense<0.000000e+00> : vector<4x128xf32>
    %271 = tpu.matmul %269, %270, %cst_78 {dimension_numbers = #tpu.dot_dimension_numbers<[1], [0], [0], [1], [0, 0, 1, 1], [], []>} : vector<4x32xbf16>, vector<32x128xbf16>, vector<4x128xf32> -> vector<4x128xf32>
    %c0_79 = arith.constant 0 : index
    %c0_80 = arith.constant 0 : index
    %272 = vector.load %arg9[%c0_79, %c0_80] : memref<1x128xf32, #tpu.memory_space<vmem>>, vector<1x128xf32>
    %273 = vector.broadcast %272 : vector<1x128xf32> to vector<4x128xf32>
    %274 = arith.addf %271, %273 : vector<4x128xf32>
    %c0_81 = arith.constant 0 : index
    %c0_82 = arith.constant 0 : index
    %c0_83 = arith.constant 0 : index
    %275 = vector.load %arg10[%c0_81, %c0_82, %c0_83] : memref<1x4x128xf32, #tpu.memory_space<vmem>>, vector<1x4x128xf32>
    %276 = vector.shape_cast %275 : vector<1x4x128xf32> to vector<4x128xf32>
    %277 = vector.shape_cast %274 : vector<4x128xf32> to vector<1x4x128xf32>
    tpu.vector_store %arg10[%c0_81, %c0_82, %c0_83], %277 {strides = array<i32>} : memref<1x4x128xf32, #tpu.memory_space<vmem>>, vector<1x4x128xf32>,
    return
  }
  func.func @transform_0(%arg0: i32) -> (i32, i32, i32) {
    %c0_i32 = arith.constant 0 : i32
    %c0_i32_0 = arith.constant 0 : i32
    %c0_i32_1 = arith.constant 0 : i32
    return %arg0, %c0_i32, %c0_i32_0 : i32, i32, i32
  }
  func.func @transform_1(%arg0: i32) -> (i32, i32, i32) {
    %c0_i32 = arith.constant 0 : i32
    %c0_i32_0 = arith.constant 0 : i32
    %c0_i32_1 = arith.constant 0 : i32
    return %arg0, %c0_i32, %c0_i32_0 : i32, i32, i32
  }
  func.func @transform_2(%arg0: i32) -> (i32, i32) {
    %c0_i32 = arith.constant 0 : i32
    %c0_i32_0 = arith.constant 0 : i32
    %c0_i32_1 = arith.constant 0 : i32
    return %c0_i32, %c0_i32_0 : i32, i32
  }
  func.func @transform_3(%arg0: i32) -> (i32, i32) {
    %c0_i32 = arith.constant 0 : i32
    %c0_i32_0 = arith.constant 0 : i32
    %c0_i32_1 = arith.constant 0 : i32
    return %c0_i32, %c0_i32_0 : i32, i32
  }
  func.func @transform_4(%arg0: i32) -> (i32, i32) {
    %c0_i32 = arith.constant 0 : i32
    %c0_i32_0 = arith.constant 0 : i32
    %c0_i32_1 = arith.constant 0 : i32
    return %c0_i32, %c0_i32_0 : i32, i32
  }
  func.func @transform_5(%arg0: i32) -> (i32, i32) {
    %c0_i32 = arith.constant 0 : i32
    %c0_i32_0 = arith.constant 0 : i32
    %c0_i32_1 = arith.constant 0 : i32
    return %c0_i32, %c0_i32_0 : i32, i32
  }
  func.func @transform_6(%arg0: i32) -> (i32, i32) {
    %c0_i32 = arith.constant 0 : i32
    %c0_i32_0 = arith.constant 0 : i32
    %c0_i32_1 = arith.constant 0 : i32
    return %c0_i32, %c0_i32_0 : i32, i32
  }
  func.func @transform_7(%arg0: i32) -> (i32, i32) {
    %c0_i32 = arith.constant 0 : i32
    %c0_i32_0 = arith.constant 0 : i32
    %c0_i32_1 = arith.constant 0 : i32
    return %c0_i32, %c0_i32_0 : i32, i32
  }
  func.func @transform_8(%arg0: i32) -> (i32, i32) {
    %c0_i32 = arith.constant 0 : i32
    %c0_i32_0 = arith.constant 0 : i32
    %c0_i32_1 = arith.constant 0 : i32
    return %c0_i32, %c0_i32_0 : i32, i32
  }
  func.func @transform_9(%arg0: i32) -> (i32, i32, i32) {
    %c0_i32 = arith.constant 0 : i32
    %c0_i32_0 = arith.constant 0 : i32
    %c0_i32_1 = arith.constant 0 : i32
    return %arg0, %c0_i32, %c0_i32_0 : i32, i32, i32
  }
}

</mosaic_0001>

<llo_original>
// kernel: tpu_custom_call.1
$region0: #{tpu_custom_call.1}
  #allocation0 [shape = 'u32[]', space=smem, size = 0x4, offset = 0x4, fixed_abs, tag = 'smem constant byte address 0x4 - core index']
  #allocation1 [shape = 'u32[72,128]{1,0:T(1,128)}', space=vmem, size = 0x9000, scoped, tag = 'internal scratch']
  #allocation2 [shape = 'f32[4,256]{1,0:T(4,128)}', space=vmem, size = 0x1000, scoped, tag = 'scratch operand']
  %s0 = inlined_call_operand.vmem [shape: bf16[2,4,256], index: 0, kind: input, shape index: {}]
  %s1 = inlined_call_operand.vmem [shape: bf16[2,4,4], index: 1, kind: input, shape index: {}]
  %s2 = inlined_call_operand.vmem [shape: bf16[256,16], index: 2, kind: input, shape index: {}]
  %s3 = inlined_call_operand.vmem [shape: f32[1,256], index: 3, kind: input, shape index: {}]
  %s4 = inlined_call_operand.vmem [shape: bf16[256,32], index: 4, kind: input, shape index: {}]
  %s5 = inlined_call_operand.vmem [shape: bf16[32,2], index: 5, kind: input, shape index: {}]
  %s6 = inlined_call_operand.vmem [shape: f32[1,32], index: 6, kind: input, shape index: {}]
  %s7 = inlined_call_operand.vmem [shape: bf16[32,128], index: 7, kind: input, shape index: {}]
  %s8 = inlined_call_operand.vmem [shape: f32[1,128], index: 8, kind: input, shape index: {}]
  %s9 = inlined_call_operand.hbm [shape: f32[2,4,128], index: 9, kind: output, shape index: {}]
  %s10 = sld [smem:[#allocation0]]
  $region69: #{tpu_custom_call.1} parent=0
    _
  %s12 = ssub.s32 1, %s10
  %s13 = scalar_select 0, %s12, %s10
  $region1: #{tpu_custom_call.1} parent=0
    #allocation3 [shape = 'u8[4096]{0}', space=vmem, size = 0x1000, scoped, tag = 'output window, operand 0']
    #allocation4 [shape = 's32[2]{0}', space=sflag, size = 0x8, scoped, tag = 'scoped memory for tpu_custom_call.1']
    %14 = vsyncpa [#allocation4], 0
    %s15 = scalar_lea.sflag [#allocation4], 1
    %16 = vsyncpa %s15, 0
    loop: start=0, step=1, limit=4
    $region2: #{tpu_custom_call.1} parent=1 // loop_pre_header
      _
    $region3: #{tpu_custom_call.1} parent=1 // loop_header
      %s18 = sphi 0, %s22
      %p19 = scmp.ge.s32.totalorder %s18, 4
      %s28 = sphi 0, %s30
      %s31 = sphi 0, %s28
      %s32 = sphi 0, %s31
      %s48 = sphi 0, %s32
      %s54 = sphi 0, %s56
      %s57 = sphi 0, %s54
      %s58 = sphi 0, %s57
      %s74 = sphi 0, %s58
      %s78 = sphi 0, %s78
      %s80 = sphi 0, %s78
      %s81 = sphi 0, %s80
      %s95 = sphi 0, %s81
      %s99 = sphi 0, %s99
      %s101 = sphi 0, %s99
      %s102 = sphi 0, %s101
      %s116 = sphi 0, %s102
      %s120 = sphi 0, %s120
      %s122 = sphi 0, %s120
      %s123 = sphi 0, %s122
      %s137 = sphi 0, %s123
      %s141 = sphi 0, %s141
      %s143 = sphi 0, %s141
      %s144 = sphi 0, %s143
      %s158 = sphi 0, %s144
      %s162 = sphi 0, %s162
      %s164 = sphi 0, %s162
      %s165 = sphi 0, %s164
      %s179 = sphi 0, %s165
      %s183 = sphi 0, %s183
      %s185 = sphi 0, %s183
      %s186 = sphi 0, %s185
      %s200 = sphi 0, %s186
      %s204 = sphi 0, %s204
      %s206 = sphi 0, %s204
      %s207 = sphi 0, %s206
      %s221 = sphi 0, %s207
      %s227 = sphi 0, %s229
      %s230 = sphi 0, %s227
      %s231 = sphi 0, %s230
      %s247 = sphi 0, %s231
    $region4: #{tpu_custom_call.1} parent=1 // loop_header_branch
      %21 = sbr.rel (%p19) target = $region8
    $region5: #{tpu_custom_call.1} parent=1 // loop_body
      %s23 = ssub.s32 %s18, 1
      %s24 = ssub.s32 %s18, 2
      %s25 = sadd.s32 %s18, 1
      %s26 = ssub.s32 %s18, %s25
      %p27 = scmp.eq.s32.totalorder %s26, 0
      %s29 = sadd.s32 %s28, 1
      %s30 = scalar_select %p27, %s28, %s29
      %p33 = pneg %p27
      %p34 = scmp.eq.s32.totalorder %s18, 1
      %p35 = por %p33, %p34
      %p36 = scmp.ne.s32.totalorder %s28, %s31
      %p37 = scmp.eq.s32.totalorder %s18, 0
      %p38 = por %p36, %p37
      %p39 = scmp.ne.s32.totalorder %s28, %s31
      %p40 = scmp.eq.s32.totalorder %s23, 1
      %p41 = por %p39, %p40
      %p42 = scmp.ne.s32.totalorder %s31, %s32
      %p43 = scmp.eq.s32.totalorder %s23, 0
      %p44 = por %p42, %p43
      %p45 = scmp.ne.s32.totalorder %s31, %s32
      %p46 = scmp.eq.s32.totalorder %s24, 1
      %p47 = por %p45, %p46
      %p49 = scmp.ne.s32.totalorder %s32, %s48
      %p50 = scmp.eq.s32.totalorder %s24, 0
      %p51 = por %p49, %p50
      %s52 = ssub.s32 %s18, %s25
      %p53 = scmp.eq.s32.totalorder %s52, 0
      %s55 = sadd.s32 %s54, 1
      %s56 = scalar_select %p53, %s54, %s55
      %p59 = pneg %p53
      %p60 = scmp.eq.s32.totalorder %s18, 1
      %p61 = por %p59, %p60
      %p62 = scmp.ne.s32.totalorder %s54, %s57
      %p63 = scmp.eq.s32.totalorder %s18, 0
      %p64 = por %p62, %p63
      %p65 = scmp.ne.s32.totalorder %s54, %s57
      %p66 = scmp.eq.s32.totalorder %s23, 1
      %p67 = por %p65, %p66
      %p68 = scmp.ne.s32.totalorder %s57, %s58
      %p69 = scmp.eq.s32.totalorder %s23, 0
      %p70 = por %p68, %p69
      %p71 = scmp.ne.s32.totalorder %s57, %s58
      %p72 = scmp.eq.s32.totalorder %s24, 1
      %p73 = por %p71, %p72
      %p75 = scmp.ne.s32.totalorder %s58, %s74
      %p76 = scmp.eq.s32.totalorder %s24, 0
      %p77 = por %p75, %p76
      %s79 = sadd.s32 %s78, 1
      %p82 = scmp.eq.s32.totalorder %s18, 1
      %p83 = scmp.ne.s32.totalorder %s78, %s80
      %p84 = scmp.eq.s32.totalorder %s18, 0
      %p85 = por %p83, %p84
      %p86 = scmp.ne.s32.totalorder %s78, %s80
      %p87 = scmp.eq.s32.totalorder %s23, 1
      %p88 = por %p86, %p87
      %p89 = scmp.ne.s32.totalorder %s80, %s81
      %p90 = scmp.eq.s32.totalorder %s23, 0
      %p91 = por %p89, %p90
      %p92 = scmp.ne.s32.totalorder %s80, %s81
      %p93 = scmp.eq.s32.totalorder %s24, 1
      %p94 = por %p92, %p93
      %p96 = scmp.ne.s32.totalorder %s81, %s95
      %p97 = scmp.eq.s32.totalorder %s24, 0
      %p98 = por %p96, %p97
      %s100 = sadd.s32 %s99, 1
      %p103 = scmp.eq.s32.totalorder %s18, 1
      %p104 = scmp.ne.s32.totalorder %s99, %s101
      %p105 = scmp.eq.s32.totalorder %s18, 0
      %p106 = por %p104, %p105
      %p107 = scmp.ne.s32.totalorder %s99, %s101
      %p108 = scmp.eq.s32.totalorder %s23, 1
      %p109 = por %p107, %p108
      %p110 = scmp.ne.s32.totalorder %s101, %s102
      %p111 = scmp.eq.s32.totalorder %s23, 0
      %p112 = por %p110, %p111
      %p113 = scmp.ne.s32.totalorder %s101, %s102
      %p114 = scmp.eq.s32.totalorder %s24, 1
      %p115 = por %p113, %p114
      %p117 = scmp.ne.s32.totalorder %s102, %s116
      %p118 = scmp.eq.s32.totalorder %s24, 0
      %p119 = por %p117, %p118
      %s121 = sadd.s32 %s120, 1
      %p124 = scmp.eq.s32.totalorder %s18, 1
      %p125 = scmp.ne.s32.totalorder %s120, %s122
      %p126 = scmp.eq.s32.totalorder %s18, 0
      %p127 = por %p125, %p126
      %p128 = scmp.ne.s32.totalorder %s120, %s122
      %p129 = scmp.eq.s32.totalorder %s23, 1
      %p130 = por %p128, %p129
      %p131 = scmp.ne.s32.totalorder %s122, %s123
      %p132 = scmp.eq.s32.totalorder %s23, 0
      %p133 = por %p131, %p132
      %p134 = scmp.ne.s32.totalorder %s122, %s123
      %p135 = scmp.eq.s32.totalorder %s24, 1
      %p136 = por %p134, %p135
      %p138 = scmp.ne.s32.totalorder %s123, %s137
      %p139 = scmp.eq.s32.totalorder %s24, 0
      %p140 = por %p138, %p139
      %s142 = sadd.s32 %s141, 1
      %p145 = scmp.eq.s32.totalorder %s18, 1
      %p146 = scmp.ne.s32.totalorder %s141, %s143
      %p147 = scmp.eq.s32.totalorder %s18, 0
      %p148 = por %p146, %p147
      %p149 = scmp.ne.s32.totalorder %s141, %s143
      %p150 = scmp.eq.s32.totalorder %s23, 1
      %p151 = por %p149, %p150
      %p152 = scmp.ne.s32.totalorder %s143, %s144
      %p153 = scmp.eq.s32.totalorder %s23, 0
      %p154 = por %p152, %p153
      %p155 = scmp.ne.s32.totalorder %s143, %s144
      %p156 = scmp.eq.s32.totalorder %s24, 1
      %p157 = por %p155, %p156
      %p159 = scmp.ne.s32.totalorder %s144, %s158
      %p160 = scmp.eq.s32.totalorder %s24, 0
      %p161 = por %p159, %p160
      %s163 = sadd.s32 %s162, 1
      %p166 = scmp.eq.s32.totalorder %s18, 1
      %p167 = scmp.ne.s32.totalorder %s162, %s164
      %p168 = scmp.eq.s32.totalorder %s18, 0
      %p169 = por %p167, %p168
      %p170 = scmp.ne.s32.totalorder %s162, %s164
      %p171 = scmp.eq.s32.totalorder %s23, 1
      %p172 = por %p170, %p171
      %p173 = scmp.ne.s32.totalorder %s164, %s165
      %p174 = scmp.eq.s32.totalorder %s23, 0
      %p175 = por %p173, %p174
      %p176 = scmp.ne.s32.totalorder %s164, %s165
      %p177 = scmp.eq.s32.totalorder %s24, 1
      %p178 = por %p176, %p177
      %p180 = scmp.ne.s32.totalorder %s165, %s179
      %p181 = scmp.eq.s32.totalorder %s24, 0
      %p182 = por %p180, %p181
      %s184 = sadd.s32 %s183, 1
      %p187 = scmp.eq.s32.totalorder %s18, 1
      %p188 = scmp.ne.s32.totalorder %s183, %s185
      %p189 = scmp.eq.s32.totalorder %s18, 0
      %p190 = por %p188, %p189
      %p191 = scmp.ne.s32.totalorder %s183, %s185
      %p192 = scmp.eq.s32.totalorder %s23, 1
      %p193 = por %p191, %p192
      %p194 = scmp.ne.s32.totalorder %s185, %s186
      %p195 = scmp.eq.s32.totalorder %s23, 0
      %p196 = por %p194, %p195
      %p197 = scmp.ne.s32.totalorder %s185, %s186
      %p198 = scmp.eq.s32.totalorder %s24, 1
      %p199 = por %p197, %p198
      %p201 = scmp.ne.s32.totalorder %s186, %s200
      %p202 = scmp.eq.s32.totalorder %s24, 0
      %p203 = por %p201, %p202
      %s205 = sadd.s32 %s204, 1
      %p208 = scmp.eq.s32.totalorder %s18, 1
      %p209 = scmp.ne.s32.totalorder %s204, %s206
      %p210 = scmp.eq.s32.totalorder %s18, 0
      %p211 = por %p209, %p210
      %p212 = scmp.ne.s32.totalorder %s204, %s206
      %p213 = scmp.eq.s32.totalorder %s23, 1
      %p214 = por %p212, %p213
      %p215 = scmp.ne.s32.totalorder %s206, %s207
      %p216 = scmp.eq.s32.totalorder %s23, 0
      %p217 = por %p215, %p216
      %p218 = scmp.ne.s32.totalorder %s206, %s207
      %p219 = scmp.eq.s32.totalorder %s24, 1
      %p220 = por %p218, %p219
      %p222 = scmp.ne.s32.totalorder %s207, %s221
      %p223 = scmp.eq.s32.totalorder %s24, 0
      %p224 = por %p222, %p223
      %s225 = ssub.s32 %s18, %s25
      %p226 = scmp.eq.s32.totalorder %s225, 0
      %s228 = sadd.s32 %s227, 1
      %s229 = scalar_select %p226, %s227, %s228
      %p232 = pneg %p226
      %p233 = scmp.eq.s32.totalorder %s18, 1
      %p234 = por %p232, %p233
      %p235 = scmp.ne.s32.totalorder %s227, %s230
      %p236 = scmp.eq.s32.totalorder %s18, 0
      %p237 = por %p235, %p236
      %p238 = scmp.ne.s32.totalorder %s227, %s230
      %p239 = scmp.eq.s32.totalorder %s23, 1
      %p240 = por %p238, %p239
      %p241 = scmp.ne.s32.totalorder %s230, %s231
      %p242 = scmp.eq.s32.totalorder %s23, 0
      %p243 = por %p241, %p242
      %p244 = scmp.ne.s32.totalorder %s230, %s231
      %p245 = scmp.eq.s32.totalorder %s24, 1
      %p246 = por %p244, %p245
      %p248 = scmp.ne.s32.totalorder %s231, %s247
      %p249 = scmp.eq.s32.totalorder %s24, 0
      %p250 = por %p248, %p249
      %p251 = scmp.le.s32.totalorder 1, %s18
      %p252 = scmp.lt.s32.totalorder %s18, 3
      %p253 = pnand %p251, %p252
      %p254 = pneg %p253
      // Predicated region
      $region9: #{tpu_custom_call.1} parent=5 // pred_check
        _
      $region10: #{tpu_custom_call.1} parent=5 // pred_check_branch
        %256 = sbr.rel (%p253) target = $region12
      $region11: #{tpu_custom_call.1} parent=5 // pred_region
        %s257 = ssub.s32 %s18, 1
        // Predicated region
        $region13: #{tpu_custom_call.1} parent=11 // pred_check
          %p258 = pneg %p91
        $region14: #{tpu_custom_call.1} parent=11 // pred_check_branch
          %260 = sbr.rel (%p258) target = $region16
        $region15: #{tpu_custom_call.1} parent=11 // pred_region
          _
        $region16: #{tpu_custom_call.1} parent=11 // pred_fallthru
          _
        // Predicated region
        $region17: #{tpu_custom_call.1} parent=11 // pred_check
          %p261 = pneg %p112
        $region18: #{tpu_custom_call.1} parent=11 // pred_check_branch
          %263 = sbr.rel (%p261) target = $region20
        $region19: #{tpu_custom_call.1} parent=11 // pred_region
          _
        $region20: #{tpu_custom_call.1} parent=11 // pred_fallthru
          _
        // Predicated region
        $region21: #{tpu_custom_call.1} parent=11 // pred_check
          %p264 = pneg %p133
        $region22: #{tpu_custom_call.1} parent=11 // pred_check_branch
          %266 = sbr.rel (%p264) target = $region24
        $region23: #{tpu_custom_call.1} parent=11 // pred_region
          _
        $region24: #{tpu_custom_call.1} parent=11 // pred_fallthru
          _
        // Predicated region
        $region25: #{tpu_custom_call.1} parent=11 // pred_check
          %p267 = pneg %p154
        $region26: #{tpu_custom_call.1} parent=11 // pred_check_branch
          %269 = sbr.rel (%p267) target = $region28
        $region27: #{tpu_custom_call.1} parent=11 // pred_region
          _
        $region28: #{tpu_custom_call.1} parent=11 // pred_fallthru
          _
        // Predicated region
        $region29: #{tpu_custom_call.1} parent=11 // pred_check
          %p270 = pneg %p175
        $region30: #{tpu_custom_call.1} parent=11 // pred_check_branch
          %272 = sbr.rel (%p270) target = $region32
        $region31: #{tpu_custom_call.1} parent=11 // pred_region
          _
        $region32: #{tpu_custom_call.1} parent=11 // pred_fallthru
          _
        // Predicated region
        $region33: #{tpu_custom_call.1} parent=11 // pred_check
          %p273 = pneg %p196
        $region34: #{tpu_custom_call.1} parent=11 // pred_check_branch
          %275 = sbr.rel (%p273) target = $region36
        $region35: #{tpu_custom_call.1} parent=11 // pred_region
          _
        $region36: #{tpu_custom_call.1} parent=11 // pred_fallthru
          _
        // Predicated region
        $region37: #{tpu_custom_call.1} parent=11 // pred_check
          %p276 = pneg %p217
        $region38: #{tpu_custom_call.1} parent=11 // pred_check_branch
          %278 = sbr.rel (%p276) target = $region40
        $region39: #{tpu_custom_call.1} parent=11 // pred_region
          _
        $region40: #{tpu_custom_call.1} parent=11 // pred_fallthru
          _
      $region12: #{tpu_custom_call.1} parent=5 // pred_fallthru
        _
      %p279 = scmp.lt.s32.totalorder %s18, 2
      // Predicated region
      $region41: #{tpu_custom_call.1} parent=5 // pred_check
        %p280 = pneg %p279
      $region42: #{tpu_custom_call.1} parent=5 // pred_check_branch
        %282 = sbr.rel (%p280) target = $region44
      $region43: #{tpu_custom_call.1} parent=5 // pred_region
        // Predicated region
        $region45: #{tpu_custom_call.1} parent=43 // pred_check
          %p283 = pneg %p38
        $region46: #{tpu_custom_call.1} parent=43 // pred_check_branch
          %285 = sbr.rel (%p283) target = $region48
        $region47: #{tpu_custom_call.1} parent=43 // pred_region
          %p286 = scmp.lt.s32.totalorder %s18, 1
          %s287 = scalar_select %p286, %s18, 1
          %s288 = smul.addr %s287, 2
          %s289 = smul.addr %s288, 2
          %s290 = scalar_lea.vmem %s0, %s289
        $region48: #{tpu_custom_call.1} parent=43 // pred_fallthru
          _
        // Predicated region
        $region49: #{tpu_custom_call.1} parent=43 // pred_check
          %p291 = pneg %p64
        $region50: #{tpu_custom_call.1} parent=43 // pred_check_branch
          %293 = sbr.rel (%p291) target = $region52
        $region51: #{tpu_custom_call.1} parent=43 // pred_region
          %p294 = scmp.lt.s32.totalorder %s18, 1
          %s295 = scalar_select %p294, %s18, 1
          %s296 = smul.addr %s295, 2
          %s297 = scalar_lea.vmem %s1, %s296
        $region52: #{tpu_custom_call.1} parent=43 // pred_fallthru
          _
      $region44: #{tpu_custom_call.1} parent=5 // pred_fallthru
        _
      %p298 = scmp.le.s32.totalorder 1, %s18
      %p299 = scmp.lt.s32.totalorder %s18, 3
      %p300 = pnand %p298, %p299
      %p301 = pneg %p300
      // Predicated region
      $region53: #{tpu_custom_call.1} parent=5 // pred_check
        _
      $region54: #{tpu_custom_call.1} parent=5 // pred_check_branch
        %303 = sbr.rel (%p300) target = $region56
      $region55: #{tpu_custom_call.1} parent=5 // pred_region
        %s304 = ssub.s32 %s18, 1
        %p305 = scmp.lt.s32.totalorder %s23, 1
        %s306 = scalar_select %p305, %s23, 1
        %s307 = smul.addr %s306, 2
        %s308 = smul.addr %s307, 2
        %s309 = scalar_lea.vmem %s0, %s308
        %p310 = pneg %p44
        %p311 = pneg %p41
        %p312 = scmp.lt.s32.totalorder %s23, 1
        %s313 = scalar_select %p312, %s23, 1
        %s314 = smul.addr %s313, 2
        %s315 = scalar_lea.vmem %s1, %s314
        %p316 = pneg %p70
        %p317 = pneg %p67
        %p318 = pneg %p91
        %p319 = pneg %p88
        %p320 = pneg %p112
        %p321 = pneg %p109
        %p322 = pneg %p133
        %p323 = pneg %p130
        %p324 = pneg %p154
        %p325 = pneg %p151
        %p326 = pneg %p175
        %p327 = pneg %p172
        %p328 = pneg %p196
        %p329 = pneg %p193
        %p330 = pneg %p217
        %p331 = pneg %p214
        %p332 = pneg %p243
        %p333 = pneg %p240
        %s334 = sand.u32 %s230, 1
        %s335 = scalar_lea.sflag [#allocation4], %s334
        %s336 = sand.u32 %s230, 1
        %s337 = smul.addr %s336, 4
        %s338 = scalar_lea.vmem [#allocation3], %s337
        %p339 = scmp.lt.s32.totalorder %s23, 1
        %s340 = scalar_select %p339, %s23, 1
        %s341 = smul.addr %s340, 2
        %s342 = smul.addr %s341, 2
        %s343 = scalar_lea.vmem %s0, %s342
        %p344 = scmp.lt.s32.totalorder %s23, 1
        %s345 = scalar_select %p344, %s23, 1
        %s346 = smul.addr %s345, 2
        %s347 = scalar_lea.vmem %s1, %s346
        %v350 = vld [vmem:[%s347] sm:$0x3]
        %v351 = vunpack.c.l.bf16 %v350
        %vm352 = vcmp.gt.f32.partialorder %v351, 0.0
        %v353 = vld [vmem:[%s343] sm:$0xf]
        %v354 = vld [vmem:[%s2] sm:$0xf]
        %v355 = vld [vmem:[%s2 + $0x4] sm:$0xf]
        %v356 = vld [vmem:[%s2 + $0x8] sm:$0xf]
        %v357 = vld [vmem:[%s2 + $0xc] sm:$0xf]
        %v358 = vld [vmem:[%s2 + $0x10] sm:$0xf]
        %v359 = vld [vmem:[%s2 + $0x14] sm:$0xf]
        %v360 = vld [vmem:[%s2 + $0x18] sm:$0xf]
        %v361 = vld [vmem:[%s2 + $0x1c] sm:$0xf]
        %v362 = vld [vmem:[%s2 + $0x20] sm:$0xf]
        %v363 = vld [vmem:[%s2 + $0x24] sm:$0xf]
        %v364 = vld [vmem:[%s2 + $0x28] sm:$0xf]
        %v365 = vld [vmem:[%s2 + $0x2c] sm:$0xf]
        %v366 = vld [vmem:[%s2 + $0x30] sm:$0xf]
        %v367 = vld [vmem:[%s2 + $0x34] sm:$0xf]
        %v368 = vld [vmem:[%s2 + $0x38] sm:$0xf]
        %v369 = vld [vmem:[%s2 + $0x3c] sm:$0xf]
        %v370 = vld [vmem:[%s2 + $0x40] sm:$0xf]
        %v371 = vld [vmem:[%s2 + $0x44] sm:$0xf]
        %v372 = vld [vmem:[%s2 + $0x48] sm:$0xf]
        %v373 = vld [vmem:[%s2 + $0x4c] sm:$0xf]
        %v374 = vld [vmem:[%s2 + $0x50] sm:$0xf]
        %v375 = vld [vmem:[%s2 + $0x54] sm:$0xf]
        %v376 = vld [vmem:[%s2 + $0x58] sm:$0xf]
        %v377 = vld [vmem:[%s2 + $0x5c] sm:$0xf]
        %v378 = vld [vmem:[%s2 + $0x60] sm:$0xf]
        %v379 = vld [vmem:[%s2 + $0x64] sm:$0xf]
        %v380 = vld [vmem:[%s2 + $0x68] sm:$0xf]
        %v381 = vld [vmem:[%s2 + $0x6c] sm:$0xf]
        %v382 = vld [vmem:[%s2 + $0x70] sm:$0xf]
        %v383 = vld [vmem:[%s2 + $0x74] sm:$0xf]
        %v384 = vld [vmem:[%s2 + $0x78] sm:$0xf]
        %v385 = vld [vmem:[%s2 + $0x7c] sm:$0xf]
        %387 = vst [vmem:[#allocation1] ss:$4 sm:$0xff] %v353
        %v388 = vld.sshfl [vmem:[#allocation1] sm:$0xff pattern:$0x73625140]
        %v389 = vld.sshfl [vmem:[#allocation1 + $0x8] sm:$0xff pattern:$0x73625140]
        %v424 = vunpack.c.l.b16 %v354
        %v425 = vunpack.c.l.b16 %v355
        %v426 = vunpack.c.l.b16 %v356
        %v427 = vunpack.c.l.b16 %v357
        %v428 = vunpack.c.l.b16 %v358
        %v429 = vunpack.c.l.b16 %v359
        %v430 = vunpack.c.l.b16 %v360
        %v431 = vunpack.c.l.b16 %v361
        %v432 = vunpack.c.l.b16 %v362
        %v433 = vunpack.c.l.b16 %v363
        %v434 = vunpack.c.l.b16 %v364
        %v435 = vunpack.c.l.b16 %v365
        %v436 = vunpack.c.l.b16 %v366
        %v437 = vunpack.c.l.b16 %v367
        %v438 = vunpack.c.l.b16 %v368
        %v439 = vunpack.c.l.b16 %v369
        %v440 = vunpack.c.l.b16 %v370
        %v441 = vunpack.c.l.b16 %v371
        %v442 = vunpack.c.l.b16 %v372
        %v443 = vunpack.c.l.b16 %v373
        %v444 = vunpack.c.l.b16 %v374
        %v445 = vunpack.c.l.b16 %v375
        %v446 = vunpack.c.l.b16 %v376
        %v447 = vunpack.c.l.b16 %v377
        %v448 = vunpack.c.l.b16 %v378
        %v449 = vunpack.c.l.b16 %v379
        %v450 = vunpack.c.l.b16 %v380
        %v451 = vunpack.c.l.b16 %v381
        %v452 = vunpack.c.l.b16 %v382
        %v453 = vunpack.c.l.b16 %v383
        %v454 = vunpack.c.l.b16 %v384
        %v455 = vunpack.c.l.b16 %v385
        %v456 = vpack.c.b16 %v425, %v424
        %v457 = vpack.c.b16 %v427, %v426
        %v458 = vpack.c.b16 %v429, %v428
        %v459 = vpack.c.b16 %v431, %v430
        %v460 = vpack.c.b16 %v433, %v432
        %v461 = vpack.c.b16 %v435, %v434
        %v462 = vpack.c.b16 %v437, %v436
        %v463 = vpack.c.b16 %v439, %v438
        %v464 = vpack.c.b16 %v441, %v440
        %v465 = vpack.c.b16 %v443, %v442
        %v466 = vpack.c.b16 %v445, %v444
        %v467 = vpack.c.b16 %v447, %v446
        %v468 = vpack.c.b16 %v449, %v448
        %v469 = vpack.c.b16 %v451, %v450
        %v470 = vpack.c.b16 %v453, %v452
        %v471 = vpack.c.b16 %v455, %v454
        %488 = vmatpush.bf16.msra.mxu0 %v463
        %489 = vmatpush.bf16.msra.mxu0 %v462
        %490 = vmatpush.bf16.msra.mxu0 %v461
        %491 = vmatpush.bf16.msra.mxu0 %v460
        %492 = vmatpush.bf16.msra.mxu0 %v459
        %493 = vmatpush.bf16.msra.mxu0 %v458
        %494 = vmatpush.bf16.msra.mxu0 %v457
        %495 = vmatpush.bf16.msra.mxu0 %v456
        %496 = vmatmul.bf16.gmra.mxu0 %v388
        %v497 = vpop.f32.mrf.mxu0
        %v498 = vadd.f32 0.0, %v497
        %v499 = vpop.f32.mrf.mxu0
        %500 = vdwg.mxu0
        %501 = vmatpush.bf16.msra.mxu0 %v471
        %502 = vmatpush.bf16.msra.mxu0 %v470
        %503 = vmatpush.bf16.msra.mxu0 %v469
        %504 = vmatpush.bf16.msra.mxu0 %v468
        %505 = vmatpush.bf16.msra.mxu0 %v467
        %506 = vmatpush.bf16.msra.mxu0 %v466
        %507 = vmatpush.bf16.msra.mxu0 %v465
        %508 = vmatpush.bf16.msra.mxu0 %v464
        %509 = vmatmul.bf16.gmra.mxu0 %v389
        %v510 = vpop.f32.mrf.mxu0
        %v511 = vadd.f32 %v498, %v510
        %v512 = vpop.f32.mrf.mxu0
        %513 = vdwg.mxu0
        %514 = vxpose.xlu0.b32.start [1/16] %v511, 128
        %515 = vxpose.xlu0.b32.cont [2/16] 0.0, 128
        %516 = vxpose.xlu0.b32.cont [3/16] 0.0, 128
        %517 = vxpose.xlu0.b32.cont [4/16] 0.0, 128
        %518 = vxpose.xlu0.b32.cont [5/16] 0.0, 128
        %519 = vxpose.xlu0.b32.cont [6/16] 0.0, 128
        %520 = vxpose.xlu0.b32.cont [7/16] 0.0, 128
        %521 = vxpose.xlu0.b32.cont [8/16] 0.0, 128
        %522 = vxpose.xlu0.b32.cont [9/16] 0.0, 128
        %523 = vxpose.xlu0.b32.cont [10/16] 0.0, 128
        %524 = vxpose.xlu0.b32.cont [11/16] 0.0, 128
        %525 = vxpose.xlu0.b32.cont [12/16] 0.0, 128
        %526 = vxpose.xlu0.b32.cont [13/16] 0.0, 128
        %527 = vxpose.xlu0.b32.cont [14/16] 0.0, 128
        %528 = vxpose.xlu0.b32.cont [15/16] 0.0, 128
        %529 = vxpose.xlu0.b32.end [16/16] 0.0, 128
        %v530 = vpop.trf.xlu0
        %v531 = vpop.trf.xlu0
        %v532 = vpop.trf.xlu0
        %v533 = vpop.trf.xlu0
        %v534 = vpop.trf.xlu0
        %v535 = vpop.trf.xlu0
        %v536 = vpop.trf.xlu0
        %v537 = vpop.trf.xlu0
        %v538 = vpop.trf.xlu0
        %v539 = vpop.trf.xlu0
        %v540 = vpop.trf.xlu0
        %v541 = vpop.trf.xlu0
        %v542 = vpop.trf.xlu0
        %v543 = vpop.trf.xlu0
        %v544 = vpop.trf.xlu0
        %v545 = vpop.trf.xlu0
        %vm546 = vcmask 261120
        %v548 = vsel %vm546, %v353, 1065369472
        %550 = vset.pattern.permute.xlu0 8
        %551 = vperm.xlu0 %550, %v511
        %v552 = vpop.permute.xlu0 %551
        %v554 = vperm.slane %v530, 0
        %v555 = vadd.f32 %v552, %v554
        %vm556 = vcmp.gt.f32.partialorder %v555, 0.0
        %v557 = vmul.f32 %v555, 0.2
        %v558 = vsel %vm556, %v555, %v557
        %v559 = vsel %vm352, %v558, -1e+30
        %vm560 = vcmask 27648
        %v561 = vsel %vm560, %v559, -inf
        %562 = vmax.xlane.f32.xlu0 %v561
        %v563 = vpop.xlane.xlu0 %562
        %v564 = vsub.f32 %v559, %v563
        %v565 = vmul.f32 %v564, 1.442695
        %v566 = vpow.pop %v565
        %v567 = vpack.c.bf16 %v566, %v566
        %vm568 = vcmask 31744
        %v570 = vsel %vm568, %v567, 0
        %vm572 = vcmask 1041408
        %v573 = vsel %vm572, %v548, 0
        %575 = vmatpush.bf16.msra.mxu0 0
        %576 = vmatpush.bf16.msra.mxu0 0
        %577 = vmatpush.bf16.msra.mxu0 0
        %578 = vmatpush.bf16.msra.mxu0 0
        %579 = vmatpush.bf16.msra.mxu0 0
        %580 = vmatpush.bf16.msra.mxu0 0
        %581 = vmatpush.bf16.msra.mxu0 0
        %582 = vmatpush.bf16.msra.mxu0 %v573
        %583 = vmatmul.bf16.gmra.mxu0 %v570
        %v584 = vpop.f32.mrf.mxu0
        %v585 = vadd.f32 0.0, %v584
        %v586 = vpop.f32.mrf.mxu0
        %587 = vdwg.mxu0
        %v588 = vrcp.pop %v585
        %590 = vset.pattern.permute.xlu0 32
        %591 = vperm.xlu0 %590, %v588
        %v592 = vpop.permute.xlu0 %591
        %v594 = vmul.f32 %v585, %v592
        %vm595 = vcmask 257024
        %596 = vst.msk [vmem:[#allocation2] sm:$0xf] %vm595, %v594
        %597 = vst [vmem:[#allocation1] ss:$4 sm:$0xff] %v353
        %v598 = vld.sshfl [vmem:[#allocation1] sm:$0xff pattern:$0x73625140]
        %600 = vrot.lane.b32.xlu0 %v598, 96
        %v601 = vpop.permute.xlu0 %600
        %v603 = vsel %vm546, %v601, 1065369472
        %604 = vset.pattern.permute.xlu0 9
        %605 = vperm.xlu0 %604, %v511
        %v606 = vpop.permute.xlu0 %605
        %v608 = vperm.slane %v530, 1
        %v609 = vadd.f32 %v606, %v608
        %vm610 = vcmp.gt.f32.partialorder %v609, 0.0
        %v611 = vmul.f32 %v609, 0.2
        %v612 = vsel %vm610, %v609, %v611
        %v613 = vsel %vm352, %v612, -1e+30
        %v614 = vsel %vm560, %v613, -inf
        %615 = vmax.xlane.f32.xlu0 %v614
        %v616 = vpop.xlane.xlu0 %615
        %v617 = vsub.f32 %v613, %v616
        %v618 = vmul.f32 %v617, 1.442695
        %v619 = vpow.pop %v618
        %v620 = vpack.c.bf16 %v619, %v619
        %v622 = vsel %vm568, %v620, 0
        %v624 = vsel %vm572, %v603, 0
        %626 = vmatpush.bf16.msra.mxu0 0
        %627 = vmatpush.bf16.msra.mxu0 0
        %628 = vmatpush.bf16.msra.mxu0 0
        %629 = vmatpush.bf16.msra.mxu0 0
        %630 = vmatpush.bf16.msra.mxu0 0
        %631 = vmatpush.bf16.msra.mxu0 0
        %632 = vmatpush.bf16.msra.mxu0 0
        %633 = vmatpush.bf16.msra.mxu0 %v624
        %634 = vmatmul.bf16.gmra.mxu0 %v622
        %v635 = vpop.f32.mrf.mxu0
        %v636 = vadd.f32 0.0, %v635
        %v637 = vpop.f32.mrf.mxu0
        %638 = vdwg.mxu0
        %v639 = vrcp.pop %v636
        %641 = vset.pattern.permute.xlu0 32
        %642 = vperm.xlu0 %641, %v639
        %v643 = vpop.permute.xlu0 %642
        %v645 = vmul.f32 %v636, %v643
        %647 = vrot.lane.b32.xlu0 %v645, 32
        %v648 = vpop.permute.xlu0 %647
        %vm650 = vcmask 519424
        %651 = vst.msk [vmem:[#allocation2] sm:$0xf] %vm650, %v648
        %652 = vst [vmem:[#allocation1] ss:$4 sm:$0xff] %v353
        %v653 = vld.sshfl [vmem:[#allocation1] sm:$0xff pattern:$0x73625140]
        %655 = vrot.lane.b32.xlu0 %v653, 64
        %v656 = vpop.permute.xlu0 %655
        %v658 = vsel %vm546, %v656, 1065369472
        %659 = vset.pattern.permute.xlu0 10
        %660 = vperm.xlu0 %659, %v511
        %v661 = vpop.permute.xlu0 %660
        %v663 = vperm.slane %v530, 2
        %v664 = vadd.f32 %v661, %v663
        %vm665 = vcmp.gt.f32.partialorder %v664, 0.0
        %v666 = vmul.f32 %v664, 0.2
        %v667 = vsel %vm665, %v664, %v666
        %v668 = vsel %vm352, %v667, -1e+30
        %v669 = vsel %vm560, %v668, -inf
        %670 = vmax.xlane.f32.xlu0 %v669
        %v671 = vpop.xlane.xlu0 %670
        %v672 = vsub.f32 %v668, %v671
        %v673 = vmul.f32 %v672, 1.442695
        %v674 = vpow.pop %v673
        %v675 = vpack.c.bf16 %v674, %v674
        %v677 = vsel %vm568, %v675, 0
        %v679 = vsel %vm572, %v658, 0
        %681 = vmatpush.bf16.msra.mxu0 0
        %682 = vmatpush.bf16.msra.mxu0 0
        %683 = vmatpush.bf16.msra.mxu0 0
        %684 = vmatpush.bf16.msra.mxu0 0
        %685 = vmatpush.bf16.msra.mxu0 0
        %686 = vmatpush.bf16.msra.mxu0 0
        %687 = vmatpush.bf16.msra.mxu0 0
        %688 = vmatpush.bf16.msra.mxu0 %v679
        %689 = vmatmul.bf16.gmra.mxu0 %v677
        %v690 = vpop.f32.mrf.mxu0
        %v691 = vadd.f32 0.0, %v690
        %v692 = vpop.f32.mrf.mxu0
        %693 = vdwg.mxu0
        %v694 = vrcp.pop %v691
        %696 = vset.pattern.permute.xlu0 32
        %697 = vperm.xlu0 %696, %v694
        %v698 = vpop.permute.xlu0 %697
        %v700 = vmul.f32 %v691, %v698
        %702 = vrot.lane.b32.xlu0 %v700, 64
        %v703 = vpop.permute.xlu0 %702
        %vm705 = vcmask 781824
        %706 = vst.msk [vmem:[#allocation2] sm:$0xf] %vm705, %v703
        %707 = vst [vmem:[#allocation1] ss:$4 sm:$0xff] %v353
        %v708 = vld.sshfl [vmem:[#allocation1] sm:$0xff pattern:$0x73625140]
        %710 = vrot.lane.b32.xlu0 %v708, 32
        %v711 = vpop.permute.xlu0 %710
        %v713 = vsel %vm546, %v711, 1065369472
        %714 = vset.pattern.permute.xlu0 11
        %715 = vperm.xlu0 %714, %v511
        %v716 = vpop.permute.xlu0 %715
        %v718 = vperm.slane %v530, 3
        %v719 = vadd.f32 %v716, %v718
        %vm720 = vcmp.gt.f32.partialorder %v719, 0.0
        %v721 = vmul.f32 %v719, 0.2
        %v722 = vsel %vm720, %v719, %v721
        %v723 = vsel %vm352, %v722, -1e+30
        %v724 = vsel %vm560, %v723, -inf
        %725 = vmax.xlane.f32.xlu0 %v724
        %v726 = vpop.xlane.xlu0 %725
        %v727 = vsub.f32 %v723, %v726
        %v728 = vmul.f32 %v727, 1.442695
        %v729 = vpow.pop %v728
        %v730 = vpack.c.bf16 %v729, %v729
        %v732 = vsel %vm568, %v730, 0
        %v734 = vsel %vm572, %v713, 0
        %736 = vmatpush.bf16.msra.mxu0 0
        %737 = vmatpush.bf16.msra.mxu0 0
        %738 = vmatpush.bf16.msra.mxu0 0
        %739 = vmatpush.bf16.msra.mxu0 0
        %740 = vmatpush.bf16.msra.mxu0 0
        %741 = vmatpush.bf16.msra.mxu0 0
        %742 = vmatpush.bf16.msra.mxu0 0
        %743 = vmatpush.bf16.msra.mxu0 %v734
        %744 = vmatmul.bf16.gmra.mxu0 %v732
        %v745 = vpop.f32.mrf.mxu0
        %v746 = vadd.f32 0.0, %v745
        %v747 = vpop.f32.mrf.mxu0
        %748 = vdwg.mxu0
        %v749 = vrcp.pop %v746
        %751 = vset.pattern.permute.xlu0 32
        %752 = vperm.xlu0 %751, %v749
        %v753 = vpop.permute.xlu0 %752
        %v755 = vmul.f32 %v746, %v753
        %757 = vrot.lane.b32.xlu0 %v755, 96
        %v758 = vpop.permute.xlu0 %757
        %vm760 = vcmask 1044224
        %761 = vst.msk [vmem:[#allocation2] sm:$0xf] %vm760, %v758
        %762 = vst [vmem:[#allocation1] ss:$4 sm:$0xff] %v353
        %v763 = vld.sshfl [vmem:[#allocation1 + $0x8] sm:$0xff pattern:$0x73625140]
        %v764 = vsel %vm546, %v763, 1065369472
        %765 = vset.pattern.permute.xlu0 12
        %766 = vperm.xlu0 %765, %v511
        %v767 = vpop.permute.xlu0 %766
        %v769 = vperm.slane %v530, 4
        %v770 = vadd.f32 %v767, %v769
        %vm771 = vcmp.gt.f32.partialorder %v770, 0.0
        %v772 = vmul.f32 %v770, 0.2
        %v773 = vsel %vm771, %v770, %v772
        %v774 = vsel %vm352, %v773, -1e+30
        %v775 = vsel %vm560, %v774, -inf
        %776 = vmax.xlane.f32.xlu0 %v775
        %v777 = vpop.xlane.xlu0 %776
        %v778 = vsub.f32 %v774, %v777
        %v779 = vmul.f32 %v778, 1.442695
        %v780 = vpow.pop %v779
        %v781 = vpack.c.bf16 %v780, %v780
        %v783 = vsel %vm568, %v781, 0
        %v785 = vsel %vm572, %v764, 0
        %787 = vmatpush.bf16.msra.mxu0 0
        %788 = vmatpush.bf16.msra.mxu0 0
        %789 = vmatpush.bf16.msra.mxu0 0
        %790 = vmatpush.bf16.msra.mxu0 0
        %791 = vmatpush.bf16.msra.mxu0 0
        %792 = vmatpush.bf16.msra.mxu0 0
        %793 = vmatpush.bf16.msra.mxu0 0
        %794 = vmatpush.bf16.msra.mxu0 %v785
        %795 = vmatmul.bf16.gmra.mxu0 %v783
        %v796 = vpop.f32.mrf.mxu0
        %v797 = vadd.f32 0.0, %v796
        %v798 = vpop.f32.mrf.mxu0
        %799 = vdwg.mxu0
        %v800 = vrcp.pop %v797
        %802 = vset.pattern.permute.xlu0 32
        %803 = vperm.xlu0 %802, %v800
        %v804 = vpop.permute.xlu0 %803
        %v806 = vmul.f32 %v797, %v804
        %807 = vst.msk [vmem:[#allocation2 + $0x4] sm:$0xf] %vm595, %v806
        %808 = vst [vmem:[#allocation1] ss:$4 sm:$0xff] %v353
        %v809 = vld.sshfl [vmem:[#allocation1 + $0x8] sm:$0xff pattern:$0x73625140]
        %811 = vrot.lane.b32.xlu0 %v809, 96
        %v812 = vpop.permute.xlu0 %811
        %v814 = vsel %vm546, %v812, 1065369472
        %815 = vset.pattern.permute.xlu0 13
        %816 = vperm.xlu0 %815, %v511
        %v817 = vpop.permute.xlu0 %816
        %v819 = vperm.slane %v530, 5
        %v820 = vadd.f32 %v817, %v819
        %vm821 = vcmp.gt.f32.partialorder %v820, 0.0
        %v822 = vmul.f32 %v820, 0.2
        %v823 = vsel %vm821, %v820, %v822
        %v824 = vsel %vm352, %v823, -1e+30
        %v825 = vsel %vm560, %v824, -inf
        %826 = vmax.xlane.f32.xlu0 %v825
        %v827 = vpop.xlane.xlu0 %826
        %v828 = vsub.f32 %v824, %v827
        %v829 = vmul.f32 %v828, 1.442695
        %v830 = vpow.pop %v829
        %v831 = vpack.c.bf16 %v830, %v830
        %v833 = vsel %vm568, %v831, 0
        %v835 = vsel %vm572, %v814, 0
        %837 = vmatpush.bf16.msra.mxu0 0
        %838 = vmatpush.bf16.msra.mxu0 0
        %839 = vmatpush.bf16.msra.mxu0 0
        %840 = vmatpush.bf16.msra.mxu0 0
        %841 = vmatpush.bf16.msra.mxu0 0
        %842 = vmatpush.bf16.msra.mxu0 0
        %843 = vmatpush.bf16.msra.mxu0 0
        %844 = vmatpush.bf16.msra.mxu0 %v835
        %845 = vmatmul.bf16.gmra.mxu0 %v833
        %v846 = vpop.f32.mrf.mxu0
        %v847 = vadd.f32 0.0, %v846
        %v848 = vpop.f32.mrf.mxu0
        %849 = vdwg.mxu0
        %v850 = vrcp.pop %v847
        %852 = vset.pattern.permute.xlu0 32
        %853 = vperm.xlu0 %852, %v850
        %v854 = vpop.permute.xlu0 %853
        %v856 = vmul.f32 %v847, %v854
        %858 = vrot.lane.b32.xlu0 %v856, 32
        %v859 = vpop.permute.xlu0 %858
        %861 = vst.msk [vmem:[#allocation2 + $0x4] sm:$0xf] %vm650, %v859
        %862 = vst [vmem:[#allocation1] ss:$4 sm:$0xff] %v353
        %v863 = vld.sshfl [vmem:[#allocation1 + $0x8] sm:$0xff pattern:$0x73625140]
        %865 = vrot.lane.b32.xlu0 %v863, 64
        %v866 = vpop.permute.xlu0 %865
        %v868 = vsel %vm546, %v866, 1065369472
        %869 = vset.pattern.permute.xlu0 14
        %870 = vperm.xlu0 %869, %v511
        %v871 = vpop.permute.xlu0 %870
        %v873 = vperm.slane %v530, 6
        %v874 = vadd.f32 %v871, %v873
        %vm875 = vcmp.gt.f32.partialorder %v874, 0.0
        %v876 = vmul.f32 %v874, 0.2
        %v877 = vsel %vm875, %v874, %v876
        %v878 = vsel %vm352, %v877, -1e+30
        %v879 = vsel %vm560, %v878, -inf
        %880 = vmax.xlane.f32.xlu0 %v879
        %v881 = vpop.xlane.xlu0 %880
        %v882 = vsub.f32 %v878, %v881
        %v883 = vmul.f32 %v882, 1.442695
        %v884 = vpow.pop %v883
        %v885 = vpack.c.bf16 %v884, %v884
        %v887 = vsel %vm568, %v885, 0
        %v889 = vsel %vm572, %v868, 0
        %891 = vmatpush.bf16.msra.mxu0 0
        %892 = vmatpush.bf16.msra.mxu0 0
        %893 = vmatpush.bf16.msra.mxu0 0
        %894 = vmatpush.bf16.msra.mxu0 0
        %895 = vmatpush.bf16.msra.mxu0 0
        %896 = vmatpush.bf16.msra.mxu0 0
        %897 = vmatpush.bf16.msra.mxu0 0
        %898 = vmatpush.bf16.msra.mxu0 %v889
        %899 = vmatmul.bf16.gmra.mxu0 %v887
        %v900 = vpop.f32.mrf.mxu0
        %v901 = vadd.f32 0.0, %v900
        %v902 = vpop.f32.mrf.mxu0
        %903 = vdwg.mxu0
        %v904 = vrcp.pop %v901
        %906 = vset.pattern.permute.xlu0 32
        %907 = vperm.xlu0 %906, %v904
        %v908 = vpop.permute.xlu0 %907
        %v910 = vmul.f32 %v901, %v908
        %912 = vrot.lane.b32.xlu0 %v910, 64
        %v913 = vpop.permute.xlu0 %912
        %915 = vst.msk [vmem:[#allocation2 + $0x4] sm:$0xf] %vm705, %v913
        %916 = vst [vmem:[#allocation1] ss:$4 sm:$0xff] %v353
        %v917 = vld.sshfl [vmem:[#allocation1 + $0x8] sm:$0xff pattern:$0x73625140]
        %919 = vrot.lane.b32.xlu0 %v917, 32
        %v920 = vpop.permute.xlu0 %919
        %v922 = vsel %vm546, %v920, 1065369472
        %923 = vset.pattern.permute.xlu0 15
        %924 = vperm.xlu0 %923, %v511
        %v925 = vpop.permute.xlu0 %924
        %v927 = vperm.slane %v530, 7
        %v928 = vadd.f32 %v925, %v927
        %vm929 = vcmp.gt.f32.partialorder %v928, 0.0
        %v930 = vmul.f32 %v928, 0.2
        %v931 = vsel %vm929, %v928, %v930
        %v932 = vsel %vm352, %v931, -1e+30
        %v933 = vsel %vm560, %v932, -inf
        %934 = vmax.xlane.f32.xlu0 %v933
        %v935 = vpop.xlane.xlu0 %934
        %v936 = vsub.f32 %v932, %v935
        %v937 = vmul.f32 %v936, 1.442695
        %v938 = vpow.pop %v937
        %v939 = vpack.c.bf16 %v938, %v938
        %v941 = vsel %vm568, %v939, 0
        %v943 = vsel %vm572, %v922, 0
        %945 = vmatpush.bf16.msra.mxu0 0
        %946 = vmatpush.bf16.msra.mxu0 0
        %947 = vmatpush.bf16.msra.mxu0 0
        %948 = vmatpush.bf16.msra.mxu0 0
        %949 = vmatpush.bf16.msra.mxu0 0
        %950 = vmatpush.bf16.msra.mxu0 0
        %951 = vmatpush.bf16.msra.mxu0 0
        %952 = vmatpush.bf16.msra.mxu0 %v943
        %953 = vmatmul.bf16.gmra.mxu0 %v941
        %v954 = vpop.f32.mrf.mxu0
        %v955 = vadd.f32 0.0, %v954
        %v956 = vpop.f32.mrf.mxu0
        %957 = vdwg.mxu0
        %v958 = vrcp.pop %v955
        %960 = vset.pattern.permute.xlu0 32
        %961 = vperm.xlu0 %960, %v958
        %v962 = vpop.permute.xlu0 %961
        %v964 = vmul.f32 %v955, %v962
        %966 = vrot.lane.b32.xlu0 %v964, 96
        %v967 = vpop.permute.xlu0 %966
        %969 = vst.msk [vmem:[#allocation2 + $0x4] sm:$0xf] %vm760, %v967
        %v970 = vld [vmem:[#allocation2] sm:$0xff]
        %v971 = vld [vmem:[%s3] sm:$0x3]
        %v973 = vperm.slane %v971, 0
        %v974 = vperm.slane %v971, 1
        %v975 = vrot.slane %v974, 4
        %vm976 = vcmask 1043456
        %v977 = vsel %vm976, %v973, %v975
        %v979 = vadd.f32 %v970, %v977
        %v980 = vmax.f32 %v979, 0.0
        %982 = vst [vmem:[#allocation1] ss:$2 sm:$0xff] %v980
        %v983 = vld.sshfl [vmem:[#allocation1] sm:$0xff pattern:$0x75316420]
        %v984 = vld.sshfl [vmem:[#allocation1 + $0x8] sm:$0xff pattern:$0x75316420]
        %v987 = vpack.c.bf16 %v983, %v983
        %v988 = vpack.c.bf16 %v984, %v984
        %v989 = vld [vmem:[%s4] sm:$0xf]
        %v990 = vld [vmem:[%s4 + $0x4] sm:$0xf]
        %v991 = vld [vmem:[%s4 + $0x8] sm:$0xf]
        %v992 = vld [vmem:[%s4 + $0xc] sm:$0xf]
        %v993 = vld [vmem:[%s4 + $0x10] sm:$0xf]
        %v994 = vld [vmem:[%s4 + $0x14] sm:$0xf]
        %v995 = vld [vmem:[%s4 + $0x18] sm:$0xf]
        %v996 = vld [vmem:[%s4 + $0x1c] sm:$0xf]
        %v997 = vld [vmem:[%s4 + $0x20] sm:$0xf]
        %v998 = vld [vmem:[%s4 + $0x24] sm:$0xf]
        %v999 = vld [vmem:[%s4 + $0x28] sm:$0xf]
        %v1000 = vld [vmem:[%s4 + $0x2c] sm:$0xf]
        %v1001 = vld [vmem:[%s4 + $0x30] sm:$0xf]
        %v1002 = vld [vmem:[%s4 + $0x34] sm:$0xf]
        %v1003 = vld [vmem:[%s4 + $0x38] sm:$0xf]
        %v1004 = vld [vmem:[%s4 + $0x3c] sm:$0xf]
        %v1005 = vld [vmem:[%s4 + $0x40] sm:$0xf]
        %v1006 = vld [vmem:[%s4 + $0x44] sm:$0xf]
        %v1007 = vld [vmem:[%s4 + $0x48] sm:$0xf]
        %v1008 = vld [vmem:[%s4 + $0x4c] sm:$0xf]
        %v1009 = vld [vmem:[%s4 + $0x50] sm:$0xf]
        %v1010 = vld [vmem:[%s4 + $0x54] sm:$0xf]
        %v1011 = vld [vmem:[%s4 + $0x58] sm:$0xf]
        %v1012 = vld [vmem:[%s4 + $0x5c] sm:$0xf]
        %v1013 = vld [vmem:[%s4 + $0x60] sm:$0xf]
        %v1014 = vld [vmem:[%s4 + $0x64] sm:$0xf]
        %v1015 = vld [vmem:[%s4 + $0x68] sm:$0xf]
        %v1016 = vld [vmem:[%s4 + $0x6c] sm:$0xf]
        %v1017 = vld [vmem:[%s4 + $0x70] sm:$0xf]
        %v1018 = vld [vmem:[%s4 + $0x74] sm:$0xf]
        %v1019 = vld [vmem:[%s4 + $0x78] sm:$0xf]
        %v1020 = vld [vmem:[%s4 + $0x7c] sm:$0xf]
        %v1053 = vunpack.c.l.b16 %v989
        %v1054 = vunpack.c.l.b16 %v990
        %v1055 = vunpack.c.l.b16 %v991
        %v1056 = vunpack.c.l.b16 %v992
        %v1057 = vunpack.c.l.b16 %v993
        %v1058 = vunpack.c.l.b16 %v994
        %v1059 = vunpack.c.l.b16 %v995
        %v1060 = vunpack.c.l.b16 %v996
        %v1061 = vunpack.c.l.b16 %v997
        %v1062 = vunpack.c.l.b16 %v998
        %v1063 = vunpack.c.l.b16 %v999
        %v1064 = vunpack.c.l.b16 %v1000
        %v1065 = vunpack.c.l.b16 %v1001
        %v1066 = vunpack.c.l.b16 %v1002
        %v1067 = vunpack.c.l.b16 %v1003
        %v1068 = vunpack.c.l.b16 %v1004
        %v1069 = vunpack.c.l.b16 %v1005
        %v1070 = vunpack.c.l.b16 %v1006
        %v1071 = vunpack.c.l.b16 %v1007
        %v1072 = vunpack.c.l.b16 %v1008
        %v1073 = vunpack.c.l.b16 %v1009
        %v1074 = vunpack.c.l.b16 %v1010
        %v1075 = vunpack.c.l.b16 %v1011
        %v1076 = vunpack.c.l.b16 %v1012
        %v1077 = vunpack.c.l.b16 %v1013
        %v1078 = vunpack.c.l.b16 %v1014
        %v1079 = vunpack.c.l.b16 %v1015
        %v1080 = vunpack.c.l.b16 %v1016
        %v1081 = vunpack.c.l.b16 %v1017
        %v1082 = vunpack.c.l.b16 %v1018
        %v1083 = vunpack.c.l.b16 %v1019
        %v1084 = vunpack.c.l.b16 %v1020
        %v1085 = vpack.c.b16 %v1054, %v1053
        %v1086 = vpack.c.b16 %v1056, %v1055
        %v1087 = vpack.c.b16 %v1058, %v1057
        %v1088 = vpack.c.b16 %v1060, %v1059
        %v1089 = vpack.c.b16 %v1062, %v1061
        %v1090 = vpack.c.b16 %v1064, %v1063
        %v1091 = vpack.c.b16 %v1066, %v1065
        %v1092 = vpack.c.b16 %v1068, %v1067
        %v1093 = vpack.c.b16 %v1070, %v1069
        %v1094 = vpack.c.b16 %v1072, %v1071
        %v1095 = vpack.c.b16 %v1074, %v1073
        %v1096 = vpack.c.b16 %v1076, %v1075
        %v1097 = vpack.c.b16 %v1078, %v1077
        %v1098 = vpack.c.b16 %v1080, %v1079
        %v1099 = vpack.c.b16 %v1082, %v1081
        %v1100 = vpack.c.b16 %v1084, %v1083
        %1117 = vmatpush.bf16.msra.mxu0 %v1092
        %1118 = vmatpush.bf16.msra.mxu0 %v1091
        %1119 = vmatpush.bf16.msra.mxu0 %v1090
        %1120 = vmatpush.bf16.msra.mxu0 %v1089
        %1121 = vmatpush.bf16.msra.mxu0 %v1088
        %1122 = vmatpush.bf16.msra.mxu0 %v1087
        %1123 = vmatpush.bf16.msra.mxu0 %v1086
        %1124 = vmatpush.bf16.msra.mxu0 %v1085
        %1125 = vmatmul.bf16.gmra.mxu0 %v987
        %v1126 = vpop.f32.mrf.mxu0
        %v1127 = vadd.f32 0.0, %v1126
        %v1128 = vpop.f32.mrf.mxu0
        %1129 = vdwg.mxu0
        %1130 = vmatpush.bf16.msra.mxu0 %v1100
        %1131 = vmatpush.bf16.msra.mxu0 %v1099
        %1132 = vmatpush.bf16.msra.mxu0 %v1098
        %1133 = vmatpush.bf16.msra.mxu0 %v1097
        %1134 = vmatpush.bf16.msra.mxu0 %v1096
        %1135 = vmatpush.bf16.msra.mxu0 %v1095
        %1136 = vmatpush.bf16.msra.mxu0 %v1094
        %1137 = vmatpush.bf16.msra.mxu0 %v1093
        %1138 = vmatmul.bf16.gmra.mxu0 %v988
        %v1139 = vpop.f32.mrf.mxu0
        %v1140 = vadd.f32 %v1127, %v1139
        %v1141 = vpop.f32.mrf.mxu0
        %1142 = vdwg.mxu0
        %v1143 = vpack.c.bf16 %v1140, %v1140
        %v1144 = vld [vmem:[%s5] sm:$0xf]
        %v1145 = vld [vmem:[%s5 + $0x4] sm:$0xf]
        %v1146 = vld [vmem:[%s5 + $0x8] sm:$0xf]
        %v1147 = vld [vmem:[%s5 + $0xc] sm:$0xf]
        %v1152 = vunpack.c.l.b16 %v1144
        %v1153 = vunpack.c.l.b16 %v1145
        %v1154 = vunpack.c.l.b16 %v1146
        %v1155 = vunpack.c.l.b16 %v1147
        %v1156 = vpack.c.b16 %v1153, %v1152
        %v1157 = vpack.c.b16 %v1155, %v1154
        %v1161 = vsel %vm546, %v1143, 0
        %1163 = vmatpush.bf16.msra.mxu0 0
        %1164 = vmatpush.bf16.msra.mxu0 0
        %1165 = vmatpush.bf16.msra.mxu0 0
        %1166 = vmatpush.bf16.msra.mxu0 0
        %1167 = vmatpush.bf16.msra.mxu0 0
        %1168 = vmatpush.bf16.msra.mxu0 0
        %1169 = vmatpush.bf16.msra.mxu0 %v1157
        %1170 = vmatpush.bf16.msra.mxu0 %v1156
        %1171 = vmatmul.bf16.gmra.mxu0 %v1161
        %v1172 = vpop.f32.mrf.mxu0
        %v1173 = vadd.f32 0.0, %v1172
        %v1174 = vpop.f32.mrf.mxu0
        %1175 = vdwg.mxu0
        %1176 = vxpose.xlu0.b32.start [1/16] %v1173, 128
        %1177 = vxpose.xlu0.b32.cont [2/16] 0.0, 128
        %1178 = vxpose.xlu0.b32.cont [3/16] 0.0, 128
        %1179 = vxpose.xlu0.b32.cont [4/16] 0.0, 128
        %1180 = vxpose.xlu0.b32.cont [5/16] 0.0, 128
        %1181 = vxpose.xlu0.b32.cont [6/16] 0.0, 128
        %1182 = vxpose.xlu0.b32.cont [7/16] 0.0, 128
        %1183 = vxpose.xlu0.b32.cont [8/16] 0.0, 128
        %1184 = vxpose.xlu0.b32.cont [9/16] 0.0, 128
        %1185 = vxpose.xlu0.b32.cont [10/16] 0.0, 128
        %1186 = vxpose.xlu0.b32.cont [11/16] 0.0, 128
        %1187 = vxpose.xlu0.b32.cont [12/16] 0.0, 128
        %1188 = vxpose.xlu0.b32.cont [13/16] 0.0, 128
        %1189 = vxpose.xlu0.b32.cont [14/16] 0.0, 128
        %1190 = vxpose.xlu0.b32.cont [15/16] 0.0, 128
        %1191 = vxpose.xlu0.b32.end [16/16] 0.0, 128
        %v1192 = vpop.trf.xlu0
        %v1193 = vpop.trf.xlu0
        %v1194 = vpop.trf.xlu0
        %v1195 = vpop.trf.xlu0
        %v1196 = vpop.trf.xlu0
        %v1197 = vpop.trf.xlu0
        %v1198 = vpop.trf.xlu0
        %v1199 = vpop.trf.xlu0
        %v1200 = vpop.trf.xlu0
        %v1201 = vpop.trf.xlu0
        %v1202 = vpop.trf.xlu0
        %v1203 = vpop.trf.xlu0
        %v1204 = vpop.trf.xlu0
        %v1205 = vpop.trf.xlu0
        %v1206 = vpop.trf.xlu0
        %v1207 = vpop.trf.xlu0
        %1209 = vset.pattern.permute.xlu0 1
        %1210 = vperm.xlu0 %1209, %v1173
        %v1211 = vpop.permute.xlu0 %1210
        %v1213 = vperm.slane %v1192, 0
        %v1214 = vadd.f32 %v1211, %v1213
        %vm1215 = vcmp.gt.f32.partialorder %v1214, 0.0
        %v1216 = vmul.f32 %v1214, 0.2
        %v1217 = vsel %vm1215, %v1214, %v1216
        %v1218 = vsel %vm352, %v1217, -1e+30
        %v1219 = vsel %vm560, %v1218, -inf
        %1220 = vmax.xlane.f32.xlu0 %v1219
        %v1221 = vpop.xlane.xlu0 %1220
        %v1222 = vsub.f32 %v1218, %v1221
        %v1223 = vmul.f32 %v1222, 1.442695
        %v1224 = vpow.pop %v1223
        %v1225 = vpack.c.bf16 %v1224, %v1224
        %v1226 = vsel %vm546, %v1143, 1065369472
        %v1228 = vsel %vm568, %v1225, 0
        %v1230 = vsel %vm572, %v1226, 0
        %1232 = vmatpush.bf16.msra.mxu0 0
        %1233 = vmatpush.bf16.msra.mxu0 0
        %1234 = vmatpush.bf16.msra.mxu0 0
        %1235 = vmatpush.bf16.msra.mxu0 0
        %1236 = vmatpush.bf16.msra.mxu0 0
        %1237 = vmatpush.bf16.msra.mxu0 0
        %1238 = vmatpush.bf16.msra.mxu0 0
        %1239 = vmatpush.bf16.msra.mxu0 %v1230
        %1240 = vmatmul.bf16.gmra.mxu0 %v1228
        %v1241 = vpop.f32.mrf.mxu0
        %v1242 = vadd.f32 0.0, %v1241
        %v1243 = vpop.f32.mrf.mxu0
        %1244 = vdwg.mxu0
        %v1245 = vrcp.pop %v1242
        %1247 = vset.pattern.permute.xlu0 32
        %1248 = vperm.xlu0 %1247, %v1245
        %v1249 = vpop.permute.xlu0 %1248
        %v1251 = vmul.f32 %v1242, %v1249
        %v1252 = vld [vmem:[%s6] sm:$0x1]
        %v1254 = vperm.slane %v1252, 0
        %v1256 = vadd.f32 %v1251, %v1254
        %v1257 = vpack.c.bf16 %v1256, %v1256
        %v1258 = vld [vmem:[%s7] sm:$0xf]
        %v1259 = vld [vmem:[%s7 + $0x4] sm:$0xf]
        %v1260 = vld [vmem:[%s7 + $0x8] sm:$0xf]
        %v1261 = vld [vmem:[%s7 + $0xc] sm:$0xf]
        %v1262 = vld [vmem:[%s8] sm:$0x1]
        %v1264 = vperm.slane %v1262, 0
        %v1270 = vunpack.c.l.b16 %v1258
        %v1271 = vunpack.c.l.b16 %v1259
        %v1272 = vunpack.c.l.b16 %v1260
        %v1273 = vunpack.c.l.b16 %v1261
        %v1274 = vpack.c.b16 %v1271, %v1270
        %v1275 = vpack.c.b16 %v1273, %v1272
        %v1279 = vsel %vm546, %v1257, 0
        %1281 = vmatpush.bf16.msra.mxu0 0
        %1282 = vmatpush.bf16.msra.mxu0 0
        %1283 = vmatpush.bf16.msra.mxu0 0
        %1284 = vmatpush.bf16.msra.mxu0 0
        %1285 = vmatpush.bf16.msra.mxu0 0
        %1286 = vmatpush.bf16.msra.mxu0 0
        %1287 = vmatpush.bf16.msra.mxu0 %v1275
        %1288 = vmatpush.bf16.msra.mxu0 %v1274
        %1289 = vmatmul.bf16.gmra.mxu0 %v1279
        %v1290 = vpop.f32.mrf.mxu0
        %v1291 = vadd.f32 %v1264, %v1290
        %v1292 = vpop.f32.mrf.mxu0
        %1293 = vdwg.mxu0
        %1294 = vst [vmem:[%s338] sm:$0xf] %v1291
        %s1295 = sand.u32 %s230, 1
        %s1296 = scalar_lea.sflag [#allocation4], %s1295
        %s1297 = sand.u32 %s230, 1
        %s1298 = smul.addr %s1297, 4
        %s1299 = scalar_lea.vmem [#allocation3], %s1298
        // Predicated region
        $region57: #{tpu_custom_call.1} parent=55 // pred_check
          %p1300 = pneg %p240
        $region58: #{tpu_custom_call.1} parent=55 // pred_check_branch
          %1302 = sbr.rel (%p1300) target = $region60
        $region59: #{tpu_custom_call.1} parent=55 // pred_region
          %1304 = vsyncadd %s1296, 0
          %s1305 = smul.addr %s23, 4
          %s1306 = scalar_lea.hbm %s9, %s1305
          %s1308 = sshll.u32 %s1299, 4
          %s1309 = int_to_ptr.vmem [resolvable:$true] %s1308
          %s1310 = sshll.u32 %s1306, 4
          %s1311 = int_to_ptr.hbm [resolvable:$true] %s1310
          %1313 = dma.vmem_to_hbm [thread:$0]  %s1309, 64, %s1311, %s1296
        $region60: #{tpu_custom_call.1} parent=55 // pred_fallthru
          _
      $region56: #{tpu_custom_call.1} parent=5 // pred_fallthru
        _
      %p1314 = scmp.le.s32.totalorder 2, %s18
      // Predicated region
      $region61: #{tpu_custom_call.1} parent=5 // pred_check
        %p1315 = pneg %p1314
      $region62: #{tpu_custom_call.1} parent=5 // pred_check_branch
        %1317 = sbr.rel (%p1315) target = $region64
      $region63: #{tpu_custom_call.1} parent=5 // pred_region
        %s1318 = ssub.s32 %s18, 2
        // Predicated region
        $region65: #{tpu_custom_call.1} parent=63 // pred_check
          %p1319 = pneg %p246
        $region66: #{tpu_custom_call.1} parent=63 // pred_check_branch
          %1321 = sbr.rel (%p1319) target = $region68
        $region67: #{tpu_custom_call.1} parent=63 // pred_region
          %s1322 = sand.u32 %s231, 1
          %s1323 = scalar_lea.sflag [#allocation4], %s1322
          %s1324 = sand.u32 %s231, 1
          %s1325 = smul.addr %s1324, 4
          %s1326 = scalar_lea.vmem [#allocation3], %s1325
          %1328 = dma.done %s1323, 64
        $region68: #{tpu_custom_call.1} parent=63 // pred_fallthru
          _
      $region64: #{tpu_custom_call.1} parent=5 // pred_fallthru
        _
    $region6: #{tpu_custom_call.1} parent=1 // loop_footer
      %s22 = sadd.s32 1, %s18
    $region7: #{tpu_custom_call.1} parent=1 // loop_footer_branch
      %17 = sbr.rel target = $region3
    $region8: #{tpu_custom_call.1} parent=1 // loop_exit
      _
    %1329 = vsyncpa [#allocation4], 1
    %s1330 = scalar_lea.sflag [#allocation4], 1
    %1331 = vsyncpa %s1330, 1

</llo_original>
